<compile_context>
chip_gen: v6e
topology: v6e:2x2x1
jax: 0.10.0
libtpu: 0.0.40
codegen_flags: <defaults>
</compile_context>

<pallas_src>
import functools
import math

import jax
import jax.numpy as jnp
from jax.experimental import pallas as pl
from jax.experimental.pallas import tpu as pltpu


_LN_EPS = 1e-5
_APPROX_SOFTMAX_RECIP = True   # set False for exact division in the softmax denominator


# --------------------------- per-generation VMEM budget ----------------------------

def _query_vmem_limit():
    cap = None
    try:
        cap = int(pltpu.get_tpu_info().vmem_capacity_bytes)
    except Exception:
        cap = None
    if not cap:
        cap = 64 * 1024 * 1024              # conservative fallback (v7x-sized)
    # leave ~25% headroom: ~96 MiB on v5e/v6e (128 MiB phys), ~48 MiB on v7x (64 MiB phys)
    return min(cap * 3 // 4, 100 * 1024 * 1024)


_VMEM_LIMIT = _query_vmem_limit()


def _cparams(*sems):
    return pltpu.CompilerParams(dimension_semantics=tuple(sems),
                                vmem_limit_bytes=_VMEM_LIMIT)


# ------------------- single-buffered resident weights (probed once) ----------------

def _probe_kernel(x_ref, o_ref):
    o_ref[...] = x_ref[...] + 1.0


def _single_buffer_weights_supported():
    """Probe pipeline_mode=pl.Buffered(1) on this jax/libtpu; fall back if unsupported."""
    try:
        spec = pl.BlockSpec((8, 128), lambda i: (0, 0), pipeline_mode=pl.Buffered(1))
        out = pl.pallas_call(
            _probe_kernel,
            out_shape=jax.ShapeDtypeStruct((8, 128), jnp.float32),
            grid=(2,),
            in_specs=[spec],
            out_specs=pl.BlockSpec((8, 128), lambda i: (0, 0)),
        )(jnp.zeros((8, 128), jnp.float32))
        jax.block_until_ready(out)
        return True
    except Exception:
        return False


_USE_SINGLE_BUFFER_WEIGHTS = _single_buffer_weights_supported()


def _cspec(shape, *, single=False):
    """BlockSpec for an operand whose block index never changes (weights / biases)."""
    ndim = len(shape)
    if single and _USE_SINGLE_BUFFER_WEIGHTS:
        return pl.BlockSpec(shape, lambda i: (0,) * ndim, pipeline_mode=pl.Buffered(1))
    return pl.BlockSpec(shape, lambda i: (0,) * ndim)


def _pick_tm(M, tm_default):
    """Row-tile choice: biggest tile, but always >=2 grid steps when possible (v7x megacore)."""
    if M <= 8:
        return M
    if M <= tm_default:
        half = -(-M // 2)
        return max(8, (half + 7) // 8 * 8)
    return tm_default


# --------------------------------------------------------------------------
# Kernel 1: two stacked Linears (no activation) -- encoder / decoder heads
# --------------------------------------------------------------------------

def _mlp2_kernel(x_ref, w1_ref, b1_ref, w2_ref, b2_ref, o_ref):
    # x: (tm, K); w1: (N1, K) bf16; w2: (N2, N1) bf16  (torch (out, in) layout)
    cdims = (((1,), (1,)), ((), ()))
    x = x_ref[...].astype(jnp.bfloat16)
    h = jax.lax.dot_general(x, w1_ref[...], cdims,
                            preferred_element_type=jnp.float32) + b1_ref[...]
    z = jax.lax.dot_general(h.astype(jnp.bfloat16), w2_ref[...], cdims,
                            preferred_element_type=jnp.float32) + b2_ref[...]
    o_ref[...] = z.astype(o_ref.dtype)


def mlp2(x2d, w1, b1, w2, b2, *, tm=512, out_dtype=jnp.float32):
    M, K = x2d.shape
    N1 = w1.shape[0]
    N2 = w2.shape[0]
    tm = _pick_tm(M, tm)
    return pl.pallas_call(
        _mlp2_kernel,
        out_shape=jax.ShapeDtypeStruct((M, N2), out_dtype),
        grid=(pl.cdiv(M, tm),),
        in_specs=[pl.BlockSpec((tm, K), lambda i: (i, 0)),
                  _cspec((N1, K), single=True), _cspec((1, N1)),
                  _cspec((N2, N1), single=True), _cspec((1, N2))],
        out_specs=pl.BlockSpec((tm, N2), lambda i: (i, 0)),
        compiler_params=_cparams("parallel"),
    )(x2d, w1, b1, w2, b2)


# --------------------------------------------------------------------------
# Kernel 2: fused transformer encoder layer (one grid step per batch element)
#   QKV -> per-head attention -> out-proj -> +res -> LN -> FF1(ReLU) -> FF2 -> +res -> LN
# --------------------------------------------------------------------------

def _layer_kernel(x_ref, wqkv_ref, bqkv_ref, wo_ref, bo_ref, g1_ref, be1_ref,
                  ff1w_ref, ff1b_ref, ff2w_ref, ff2b_ref, g2_ref, be2_ref,
                  o_ref, ov_ref, *, nhead, d_head):
    cdims = (((1,), (1,)), ((), ()))      # contract last dims (torch (out, in) weights)
    rdims = (((1,), (0,)), ((), ()))      # contract a.dim1 with b.dim0
    xb = x_ref[0]                          # (S, E) bf16
    x32 = xb.astype(jnp.float32)
    E = x32.shape[-1]

    # ---- attention: one full-width QKV matmul (scale already folded into Wq/bq) ----
    qkv = jax.lax.dot_general(xb, wqkv_ref[...], cdims,
                              preferred_element_type=jnp.float32) + bqkv_ref[...]

    # Per-head score / softmax / PV (these contractions are inherently D / S wide).
    # Head outputs land at their column offset in the (S, E) scratch so the output
    # projection below is a single full-width (S,E)x(E,E) matmul.
    # NOTE: static head loop keeps the column slices compile-time constant; the store
    # into ov_ref at the end of each iteration bounds each head's live values.
    # TODO(synk): KV-tiled online-softmax (flash) variant for large S; switch when the
    # (S,S) f32 tile approaches ~1/4 of usable VMEM (threshold is half on v7x: 64 MiB).
    for h in range(nhead):
        lo = h * d_head
        q = qkv[:, lo:lo + d_head]
        k = qkv[:, E + lo:E + lo + d_head]
        v = qkv[:, 2 * E + lo:2 * E + lo + d_head]
        s = jax.lax.dot_general(q.astype(jnp.bfloat16), k.astype(jnp.bfloat16),
                                cdims, preferred_element_type=jnp.float32)   # (S, S)
        s = s - jnp.max(s, axis=-1, keepdims=True)
        p = jnp.exp(s)                                                        # f32 softmax
        denom = jnp.sum(p, axis=-1, keepdims=True)
        if _APPROX_SOFTMAX_RECIP:
            p = p * pl.reciprocal(denom, approx=True)
        else:
            p = p / denom
        ov_ref[:, lo:lo + d_head] = jax.lax.dot_general(
            p.astype(jnp.bfloat16), v.astype(jnp.bfloat16), rdims,
            preferred_element_type=jnp.float32)                               # (S, D)

    attn = jax.lax.dot_general(ov_ref[...].astype(jnp.bfloat16), wo_ref[...], cdims,
                               preferred_element_type=jnp.float32) + bo_ref[...]
    y = x32 + attn
    mu = jnp.mean(y, axis=-1, keepdims=True)
    var = jnp.mean(jnp.square(y - mu), axis=-1, keepdims=True)
    y = (y - mu) * jax.lax.rsqrt(var + _LN_EPS) * g1_ref[...] + be1_ref[...]

    # ---- feed-forward: FF1 + ReLU -> FF2 -> residual -> LayerNorm ----
    h1 = jax.lax.dot_general(y.astype(jnp.bfloat16), ff1w_ref[...], cdims,
                             preferred_element_type=jnp.float32) + ff1b_ref[...]
    h1 = jnp.maximum(h1, 0.0)
    z = jax.lax.dot_general(h1.astype(jnp.bfloat16), ff2w_ref[...], cdims,
                            preferred_element_type=jnp.float32) + ff2b_ref[...]
    y2 = y + z
    mu2 = jnp.mean(y2, axis=-1, keepdims=True)
    var2 = jnp.mean(jnp.square(y2 - mu2), axis=-1, keepdims=True)
    o_ref[0] = ((y2 - mu2) * jax.lax.rsqrt(var2 + _LN_EPS) * g2_ref[...]
                + be2_ref[...]).astype(o_ref.dtype)


def transformer_layer(x, lp, nhead):
    # TODO(synk): for tiny E (< 128, e.g. the demo E=32) the (1,S,E) output store is a
    # masked partial-lane vst; pad E to 128 or emit a (B, S*E) lane-dense slab if this
    # configuration ever matters for performance.
    B, S, E = x.shape
    D = E // nhead
    nhid = lp["ff1_w"].shape[0]
    kernel = functools.partial(_layer_kernel, nhead=nhead, d_head=D)
    return pl.pallas_call(
        kernel,
        out_shape=jax.ShapeDtypeStruct((B, S, E), jnp.bfloat16),
        grid=(B,),
        in_specs=[pl.BlockSpec((1, S, E), lambda b: (b, 0, 0)),
                  _cspec((3 * E, E), single=True), _cspec((1, 3 * E)),
                  _cspec((E, E), single=True),     _cspec((1, E)),
                  _cspec((1, E)), _cspec((1, E)),
                  _cspec((nhid, E), single=True),  _cspec((1, nhid)),
                  _cspec((E, nhid), single=True),  _cspec((1, E)),
                  _cspec((1, E)), _cspec((1, E))],
        out_specs=pl.BlockSpec((1, S, E), lambda b: (b, 0, 0)),
        scratch_shapes=[pltpu.VMEM((S, E), jnp.float32)],
        compiler_params=_cparams("parallel"),
    )(x, lp["wqkv"], lp["bqkv"], lp["wo"], lp["bo"], lp["ln1_g"], lp["ln1_b"],
      lp["ff1_w"], lp["ff1_b"], lp["ff2_w"], lp["ff2_b"], lp["ln2_g"], lp["ln2_b"])


# ----------------------------- model glue ----------------------------------

def positional_encoding(S, E):
    pos = jnp.arange(S, dtype=jnp.float32)[:, None]
    div = jnp.exp(jnp.arange(0, E, 2, dtype=jnp.float32) * (-math.log(10000.0) / E))
    pe = jnp.zeros((S, E), jnp.float32)
    pe = pe.at[:, 0::2].set(jnp.sin(pos * div))
    pe = pe.at[:, 1::2].set(jnp.cos(pos * div))
    return pe


def puretran_forward(src, params, *, height, nhead, has_pe=False):
    """src: (S, B, nb_features) f32 -> (S, ceil(B/height), ntoken) f32.

    Activations are kept batch-first (B, S, E) and bf16 between kernels; the single
    transpose in/out is a one-time relayout."""
    S, B, F = src.shape
    x = jnp.transpose(src, (1, 0, 2))                       # (B, S, F)
    x2d = mlp2(x.reshape(B * S, F),
               params["enc1_w"], params["enc1_b"],
               params["enc2_w"], params["enc2_b"],
               out_dtype=jnp.bfloat16)
    E = x2d.shape[-1]
    x = x2d.reshape(B, S, E)

    if has_pe:                                              # dropout = identity (eval)
        pe = positional_encoding(S, E)                      # constant-folded under jit
        x = (x.astype(jnp.float32) + pe[None, :, :]).astype(jnp.bfloat16)

    # TODO(synk): fold the (tiny) encoder mlp2 into the first layer's fused kernel to
    # drop one more launch for latency-bound configurations.
    for lp in params["layers"]:
        x = transformer_layer(x, lp, nhead)

    x = x[::height]                                         # == torch output[:, ::height]
    B2 = x.shape[0]
    y = mlp2(x.reshape(B2 * S, E),
             params["dec1_w"], params["dec1_b"],
             params["dec2_w"], params["dec2_b"],
             out_dtype=jnp.float32)
    return jnp.transpose(y.reshape(B2, S, -1), (1, 0, 2))   # (S, B2, ntoken)


# ----------------------------- parameters -----------------------------------

def init_params(key, nb_features, ntoken, ninp, nhid, nlayers):
    """PyTorch-layout f32 parameters (nn.Linear weights are (out, in))."""
    initrange = 0.1
    keys = iter(jax.random.split(key, 8 + 8 * nlayers))

    def w(shape):
        return jax.random.uniform(next(keys), shape, jnp.float32, -initrange, initrange)

    def b(n):
        return jnp.zeros((n,), jnp.float32)

    p = {
        "enc1_w": w((ninp // 4, nb_features)), "enc1_b": b(ninp // 4),
        "enc2_w": w((ninp, ninp // 4)),        "enc2_b": b(ninp),
        "dec1_w": w((ninp // 4, ninp)),        "dec1_b": b(ninp // 4),
        "dec2_w": w((ntoken, ninp // 4)),      "dec2_b": b(ntoken),
        "layers": [],
    }
    for _ in range(nlayers):
        p["layers"].append({
            "in_proj_w": w((3 * ninp, ninp)), "in_proj_b": b(3 * ninp),
            "out_w": w((ninp, ninp)),         "out_b": b(ninp),
            "ln1_g": jnp.ones((ninp,), jnp.float32), "ln1_b": b(ninp),
            "ff1_w": w((nhid, ninp)), "ff1_b": b(nhid),
            "ff2_w": w((ninp, nhid)), "ff2_b": b(ninp),
            "ln2_g": jnp.ones((ninp,), jnp.float32), "ln2_b": b(ninp),
        })
    return p


def prepare_params(p, ninp, nhead):
    """One-time host re-layout: bf16 MXU weights in torch (out, in) layout, (1, N) biases,
    and the 1/sqrt(D) attention scale folded into the Q rows of the in-projection."""
    D = ninp // nhead
    scale = 1.0 / math.sqrt(D)
    bf = lambda a: a.astype(jnp.bfloat16)
    kp = {
        "enc1_w": bf(p["enc1_w"]), "enc1_b": p["enc1_b"].reshape(1, -1),
        "enc2_w": bf(p["enc2_w"]), "enc2_b": p["enc2_b"].reshape(1, -1),
        "dec1_w": bf(p["dec1_w"]), "dec1_b": p["dec1_b"].reshape(1, -1),
        "dec2_w": bf(p["dec2_w"]), "dec2_b": p["dec2_b"].reshape(1, -1),
        "layers": [],
    }
    row_scale = jnp.concatenate([jnp.full((ninp,), scale, jnp.float32),
                                 jnp.ones((2 * ninp,), jnp.float32)])
    for lp in p["layers"]:
        wqkv = lp["in_proj_w"] * row_scale[:, None]          # (3E, E), Q rows pre-scaled
        bqkv = lp["in_proj_b"] * row_scale
        kp["layers"].append({
            "wqkv": bf(wqkv), "bqkv": bqkv.reshape(1, -1),
            "wo": bf(lp["out_w"]), "bo": lp["out_b"].reshape(1, -1),
            "ln1_g": lp["ln1_g"].reshape(1, -1), "ln1_b": lp["ln1_b"].reshape(1, -1),
            "ff1_w": bf(lp["ff1_w"]), "ff1_b": lp["ff1_b"].reshape(1, -1),
            "ff2_w": bf(lp["ff2_w"]), "ff2_b": lp["ff2_b"].reshape(1, -1),
            "ln2_g": lp["ln2_g"].reshape(1, -1), "ln2_b": lp["ln2_b"].reshape(1, -1),
        })
    return kp


if __name__ == "__main__":
    # small shapes consistent with the module: seq=8, batch=4, nb_features=8,
    # ninp=32 (ninp//4=8), nhead=4, nhid=64, nlayers=2, ntoken=10, height=2.
    S, B, F = 8, 4, 8
    ninp, nhead, nhid, nlayers, ntoken, height = 32, 4, 64, 2, 10, 2

    key = jax.random.PRNGKey(0)
    k_in, k_par = jax.random.split(key)
    src = jax.random.normal(k_in, (S, B, F), jnp.float32)
    params = prepare_params(init_params(k_par, F, ntoken, ninp, nhid, nlayers),
                            ninp, nhead)

    fwd = jax.jit(functools.partial(puretran_forward, height=height, nhead=nhead,
                                    has_pe=False))
    out = jax.block_until_ready(fwd(src, params))
    assert out.shape == (S, (B + height - 1) // height, ntoken), out.shape
    assert bool(jnp.all(jnp.isfinite(out)))
    print("KERNEL_OK")
</pallas_src>

<mosaic_0001>
module attributes {stable_mosaic.version = 11 : i64} {
  func.func @_probe_kernel(%arg0: i32, %arg1: memref<8x128xf32, #tpu.memory_space<vmem>>, %arg2: memref<8x128xf32, #tpu.memory_space<vmem>>) attributes {dimension_semantics = [#tpu.dimension_semantics<arbitrary>], iteration_bounds = array<i64: 2>, scalar_prefetch = 0 : i64, scratch_operands = 0 : i64, tpu.core_type = #tpu.core_type<tc>, window_params = [{pipeline_mode = #tpu.pipeline_mode<synchronous>, transform_indices = @transform_0, window_bounds = array<i64: 8, 128>}, {pipeline_mode = #tpu.pipeline_mode<synchronous>, transform_indices = @transform_1, window_bounds = array<i64: 8, 128>}]} {
    %c0 = arith.constant 0 : index
    %c0_0 = arith.constant 0 : index
    %0 = vector.load %arg1[%c0, %c0_0] : memref<8x128xf32, #tpu.memory_space<vmem>>, vector<8x128xf32>
    %cst = arith.constant 1.000000e+00 : f32
    %1 = vector.broadcast %cst : f32 to vector<8x128xf32>
    %2 = arith.addf %0, %1 : vector<8x128xf32>
    %c0_1 = arith.constant 0 : index
    %c0_2 = arith.constant 0 : index
    %3 = vector.load %arg2[%c0_1, %c0_2] : memref<8x128xf32, #tpu.memory_space<vmem>>, vector<8x128xf32>
    tpu.vector_store %arg2[%c0_1, %c0_2], %2 {strides = array<i32>} : memref<8x128xf32, #tpu.memory_space<vmem>>, vector<8x128xf32>,
    return
  }
  func.func @transform_0(%arg0: i32) -> (i32, i32) {
    %c0_i32 = arith.constant 0 : i32
    %c0_i32_0 = arith.constant 0 : i32
    %c0_i32_1 = arith.constant 0 : i32
    return %c0_i32, %c0_i32_0 : i32, i32
  }
  func.func @transform_1(%arg0: i32) -> (i32, i32) {
    %c0_i32 = arith.constant 0 : i32
    %c0_i32_0 = arith.constant 0 : i32
    %c0_i32_1 = arith.constant 0 : i32
    return %c0_i32, %c0_i32_0 : i32, i32
  }
}

module attributes {stable_mosaic.version = 11 : i64} {
  func.func @_mlp2_kernel(%arg0: i32, %arg1: memref<8x32xbf16, #tpu.memory_space<vmem>>, %arg2: memref<8x32xbf16, #tpu.memory_space<vmem>>, %arg3: memref<1x8xf32, #tpu.memory_space<vmem>>, %arg4: memref<10x8xbf16, #tpu.memory_space<vmem>>, %arg5: memref<1x10xf32, #tpu.memory_space<vmem>>, %arg6: memref<8x10xf32, #tpu.memory_space<vmem>>) attributes {dimension_semantics = [#tpu.dimension_semantics<parallel>], iteration_bounds = array<i64: 2>, scalar_prefetch = 0 : i64, scratch_operands = 0 : i64, tpu.core_type = #tpu.core_type<tc>, window_params = [{transform_indices = @transform_0, window_bounds = array<i64: 8, 32>}, {pipeline_mode = #tpu.pipeline_mode<synchronous>, transform_indices = @transform_1, window_bounds = array<i64: 8, 32>}, {pipeline_mode = #tpu.pipeline_mode<synchronous>, transform_indices = @transform_2, window_bounds = array<i64: 1, 8>}, {pipeline_mode = #tpu.pipeline_mode<synchronous>, transform_indices = @transform_3, window_bounds = array<i64: 10, 8>}, {pipeline_mode = #tpu.pipeline_mode<synchronous>, transform_indices = @transform_4, window_bounds = array<i64: 1, 10>}, {transform_indices = @transform_5, window_bounds = array<i64: 8, 10>}]} {
    %c0 = arith.constant 0 : index
    %c0_0 = arith.constant 0 : index
    %0 = vector.load %arg1[%c0, %c0_0] : memref<8x32xbf16, #tpu.memory_space<vmem>>, vector<8x32xbf16>
    %c0_1 = arith.constant 0 : index
    %c0_2 = arith.constant 0 : index
    %1 = vector.load %arg2[%c0_1, %c0_2] : memref<8x32xbf16, #tpu.memory_space<vmem>>, vector<8x32xbf16>
    %cst = arith.constant dense<0.000000e+00> : vector<8x8xf32>
    %2 = tpu.matmul %0, %1, %cst {dimension_numbers = #tpu.dot_dimension_numbers<[1], [1], [0], [0], [0, 0, 1, 0], [], []>} : vector<8x32xbf16>, vector<8x32xbf16>, vector<8x8xf32> -> vector<8x8xf32>
    %c0_3 = arith.constant 0 : index
    %c0_4 = arith.constant 0 : index
    %3 = vector.load %arg3[%c0_3, %c0_4] : memref<1x8xf32, #tpu.memory_space<vmem>>, vector<1x8xf32>
    %4 = vector.broadcast %3 : vector<1x8xf32> to vector<8x8xf32>
    %5 = arith.addf %2, %4 : vector<8x8xf32>
    %6 = arith.truncf %5 : vector<8x8xf32> to vector<8x8xbf16>
    %c0_5 = arith.constant 0 : index
    %c0_6 = arith.constant 0 : index
    %7 = vector.load %arg4[%c0_5, %c0_6] : memref<10x8xbf16, #tpu.memory_space<vmem>>, vector<10x8xbf16>
    %cst_7 = arith.constant dense<0.000000e+00> : vector<8x10xf32>
    %8 = tpu.matmul %6, %7, %cst_7 {dimension_numbers = #tpu.dot_dimension_numbers<[1], [1], [0], [0], [0, 0, 1, 0], [], []>} : vector<8x8xbf16>, vector<10x8xbf16>, vector<8x10xf32> -> vector<8x10xf32>
    %c0_8 = arith.constant 0 : index
    %c0_9 = arith.constant 0 : index
    %9 = vector.load %arg5[%c0_8, %c0_9] : memref<1x10xf32, #tpu.memory_space<vmem>>, vector<1x10xf32>
    %10 = vector.broadcast %9 : vector<1x10xf32> to vector<8x10xf32>
    %11 = arith.addf %8, %10 : vector<8x10xf32>
    %c0_10 = arith.constant 0 : index
    %c0_11 = arith.constant 0 : index
    %12 = vector.load %arg6[%c0_10, %c0_11] : memref<8x10xf32, #tpu.memory_space<vmem>>, vector<8x10xf32>
    tpu.vector_store %arg6[%c0_10, %c0_11], %11 {strides = array<i32>} : memref<8x10xf32, #tpu.memory_space<vmem>>, vector<8x10xf32>,
    return
  }
  func.func @transform_0(%arg0: i32) -> (i32, i32) {
    %c0_i32 = arith.constant 0 : i32
    %c0_i32_0 = arith.constant 0 : i32
    return %arg0, %c0_i32 : i32, i32
  }
  func.func @transform_1(%arg0: i32) -> (i32, i32) {
    %c0_i32 = arith.constant 0 : i32
    %c0_i32_0 = arith.constant 0 : i32
    %c0_i32_1 = arith.constant 0 : i32
    return %c0_i32, %c0_i32_0 : i32, i32
  }
  func.func @transform_2(%arg0: i32) -> (i32, i32) {
    %c0_i32 = arith.constant 0 : i32
    %c0_i32_0 = arith.constant 0 : i32
    %c0_i32_1 = arith.constant 0 : i32
    return %c0_i32, %c0_i32_0 : i32, i32
  }
  func.func @transform_3(%arg0: i32) -> (i32, i32) {
    %c0_i32 = arith.constant 0 : i32
    %c0_i32_0 = arith.constant 0 : i32
    %c0_i32_1 = arith.constant 0 : i32
    return %c0_i32, %c0_i32_0 : i32, i32
  }
  func.func @transform_4(%arg0: i32) -> (i32, i32) {
    %c0_i32 = arith.constant 0 : i32
    %c0_i32_0 = arith.constant 0 : i32
    %c0_i32_1 = arith.constant 0 : i32
    return %c0_i32, %c0_i32_0 : i32, i32
  }
  func.func @transform_5(%arg0: i32) -> (i32, i32) {
    %c0_i32 = arith.constant 0 : i32
    %c0_i32_0 = arith.constant 0 : i32
    return %arg0, %c0_i32 : i32, i32
  }
}

module attributes {stable_mosaic.version = 11 : i64} {
  func.func @_mlp2_kernel(%arg0: i32, %arg1: memref<16x8xf32, #tpu.memory_space<vmem>>, %arg2: memref<8x8xbf16, #tpu.memory_space<vmem>>, %arg3: memref<1x8xf32, #tpu.memory_space<vmem>>, %arg4: memref<32x8xbf16, #tpu.memory_space<vmem>>, %arg5: memref<1x32xf32, #tpu.memory_space<vmem>>, %arg6: memref<16x32xbf16, #tpu.memory_space<vmem>>) attributes {dimension_semantics = [#tpu.dimension_semantics<parallel>], iteration_bounds = array<i64: 2>, scalar_prefetch = 0 : i64, scratch_operands = 0 : i64, tpu.core_type = #tpu.core_type<tc>, window_params = [{transform_indices = @transform_0, window_bounds = array<i64: 16, 8>}, {pipeline_mode = #tpu.pipeline_mode<synchronous>, transform_indices = @transform_1, window_bounds = array<i64: 8, 8>}, {pipeline_mode = #tpu.pipeline_mode<synchronous>, transform_indices = @transform_2, window_bounds = array<i64: 1, 8>}, {pipeline_mode = #tpu.pipeline_mode<synchronous>, transform_indices = @transform_3, window_bounds = array<i64: 32, 8>}, {pipeline_mode = #tpu.pipeline_mode<synchronous>, transform_indices = @transform_4, window_bounds = array<i64: 1, 32>}, {transform_indices = @transform_5, window_bounds = array<i64: 16, 32>}]} {
    %c0 = arith.constant 0 : index
    %c0_0 = arith.constant 0 : index
    %0 = vector.load %arg1[%c0, %c0_0] : memref<16x8xf32, #tpu.memory_space<vmem>>, vector<16x8xf32>
    %1 = arith.truncf %0 : vector<16x8xf32> to vector<16x8xbf16>
    %c0_1 = arith.constant 0 : index
    %c0_2 = arith.constant 0 : index
    %2 = vector.load %arg2[%c0_1, %c0_2] : memref<8x8xbf16, #tpu.memory_space<vmem>>, vector<8x8xbf16>
    %cst = arith.constant dense<0.000000e+00> : vector<16x8xf32>
    %3 = tpu.matmul %1, %2, %cst {dimension_numbers = #tpu.dot_dimension_numbers<[1], [1], [0], [0], [0, 0, 1, 0], [], []>} : vector<16x8xbf16>, vector<8x8xbf16>, vector<16x8xf32> -> vector<16x8xf32>
    %c0_3 = arith.constant 0 : index
    %c0_4 = arith.constant 0 : index
    %4 = vector.load %arg3[%c0_3, %c0_4] : memref<1x8xf32, #tpu.memory_space<vmem>>, vector<1x8xf32>
    %5 = vector.broadcast %4 : vector<1x8xf32> to vector<16x8xf32>
    %6 = arith.addf %3, %5 : vector<16x8xf32>
    %7 = arith.truncf %6 : vector<16x8xf32> to vector<16x8xbf16>
    %c0_5 = arith.constant 0 : index
    %c0_6 = arith.constant 0 : index
    %8 = vector.load %arg4[%c0_5, %c0_6] : memref<32x8xbf16, #tpu.memory_space<vmem>>, vector<32x8xbf16>
    %cst_7 = arith.constant dense<0.000000e+00> : vector<16x32xf32>
    %9 = tpu.matmul %7, %8, %cst_7 {dimension_numbers = #tpu.dot_dimension_numbers<[1], [1], [0], [0], [0, 0, 1, 0], [], []>} : vector<16x8xbf16>, vector<32x8xbf16>, vector<16x32xf32> -> vector<16x32xf32>
    %c0_8 = arith.constant 0 : index
    %c0_9 = arith.constant 0 : index
    %10 = vector.load %arg5[%c0_8, %c0_9] : memref<1x32xf32, #tpu.memory_space<vmem>>, vector<1x32xf32>
    %11 = vector.broadcast %10 : vector<1x32xf32> to vector<16x32xf32>
    %12 = arith.addf %9, %11 : vector<16x32xf32>
    %13 = arith.truncf %12 : vector<16x32xf32> to vector<16x32xbf16>
    %c0_10 = arith.constant 0 : index
    %c0_11 = arith.constant 0 : index
    %14 = vector.load %arg6[%c0_10, %c0_11] : memref<16x32xbf16, #tpu.memory_space<vmem>>, vector<16x32xbf16>
    tpu.vector_store %arg6[%c0_10, %c0_11], %13 {strides = array<i32>} : memref<16x32xbf16, #tpu.memory_space<vmem>>, vector<16x32xbf16>,
    return
  }
  func.func @transform_0(%arg0: i32) -> (i32, i32) {
    %c0_i32 = arith.constant 0 : i32
    %c0_i32_0 = arith.constant 0 : i32
    return %arg0, %c0_i32 : i32, i32
  }
  func.func @transform_1(%arg0: i32) -> (i32, i32) {
    %c0_i32 = arith.constant 0 : i32
    %c0_i32_0 = arith.constant 0 : i32
    %c0_i32_1 = arith.constant 0 : i32
    return %c0_i32, %c0_i32_0 : i32, i32
  }
  func.func @transform_2(%arg0: i32) -> (i32, i32) {
    %c0_i32 = arith.constant 0 : i32
    %c0_i32_0 = arith.constant 0 : i32
    %c0_i32_1 = arith.constant 0 : i32
    return %c0_i32, %c0_i32_0 : i32, i32
  }
  func.func @transform_3(%arg0: i32) -> (i32, i32) {
    %c0_i32 = arith.constant 0 : i32
    %c0_i32_0 = arith.constant 0 : i32
    %c0_i32_1 = arith.constant 0 : i32
    return %c0_i32, %c0_i32_0 : i32, i32
  }
  func.func @transform_4(%arg0: i32) -> (i32, i32) {
    %c0_i32 = arith.constant 0 : i32
    %c0_i32_0 = arith.constant 0 : i32
    %c0_i32_1 = arith.constant 0 : i32
    return %c0_i32, %c0_i32_0 : i32, i32
  }
  func.func @transform_5(%arg0: i32) -> (i32, i32) {
    %c0_i32 = arith.constant 0 : i32
    %c0_i32_0 = arith.constant 0 : i32
    return %arg0, %c0_i32 : i32, i32
  }
}

module attributes {stable_mosaic.version = 11 : i64} {
  func.func @_layer_kernel(%arg0: i32, %arg1: memref<1x8x32xbf16, #tpu.memory_space<vmem>>, %arg2: memref<96x32xbf16, #tpu.memory_space<vmem>>, %arg3: memref<1x96xf32, #tpu.memory_space<vmem>>, %arg4: memref<32x32xbf16, #tpu.memory_space<vmem>>, %arg5: memref<1x32xf32, #tpu.memory_space<vmem>>, %arg6: memref<1x32xf32, #tpu.memory_space<vmem>>, %arg7: memref<1x32xf32, #tpu.memory_space<vmem>>, %arg8: memref<64x32xbf16, #tpu.memory_space<vmem>>, %arg9: memref<1x64xf32, #tpu.memory_space<vmem>>, %arg10: memref<32x64xbf16, #tpu.memory_space<vmem>>, %arg11: memref<1x32xf32, #tpu.memory_space<vmem>>, %arg12: memref<1x32xf32, #tpu.memory_space<vmem>>, %arg13: memref<1x32xf32, #tpu.memory_space<vmem>>, %arg14: memref<1x8x32xbf16, #tpu.memory_space<vmem>>, %arg15: memref<8x32xf32, #tpu.memory_space<vmem>>) attributes {dimension_semantics = [#tpu.dimension_semantics<parallel>], iteration_bounds = array<i64: 4>, scalar_prefetch = 0 : i64, scratch_operands = 1 : i64, tpu.core_type = #tpu.core_type<tc>, window_params = [{transform_indices = @transform_0, window_bounds = array<i64: 1, 8, 32>}, {pipeline_mode = #tpu.pipeline_mode<synchronous>, transform_indices = @transform_1, window_bounds = array<i64: 96, 32>}, {pipeline_mode = #tpu.pipeline_mode<synchronous>, transform_indices = @transform_2, window_bounds = array<i64: 1, 96>}, {pipeline_mode = #tpu.pipeline_mode<synchronous>, transform_indices = @transform_3, window_bounds = array<i64: 32, 32>}, {pipeline_mode = #tpu.pipeline_mode<synchronous>, transform_indices = @transform_4, window_bounds = array<i64: 1, 32>}, {pipeline_mode = #tpu.pipeline_mode<synchronous>, transform_indices = @transform_5, window_bounds = array<i64: 1, 32>}, {pipeline_mode = #tpu.pipeline_mode<synchronous>, transform_indices = @transform_6, window_bounds = array<i64: 1, 32>}, {pipeline_mode = #tpu.pipeline_mode<synchronous>, transform_indices = @transform_7, window_bounds = array<i64: 64, 32>}, {pipeline_mode = #tpu.pipeline_mode<synchronous>, transform_indices = @transform_8, window_bounds = array<i64: 1, 64>}, {pipeline_mode = #tpu.pipeline_mode<synchronous>, transform_indices = @transform_9, window_bounds = array<i64: 32, 64>}, {pipeline_mode = #tpu.pipeline_mode<synchronous>, transform_indices = @transform_10, window_bounds = array<i64: 1, 32>}, {pipeline_mode = #tpu.pipeline_mode<synchronous>, transform_indices = @transform_11, window_bounds = array<i64: 1, 32>}, {pipeline_mode = #tpu.pipeline_mode<synchronous>, transform_indices = @transform_12, window_bounds = array<i64: 1, 32>}, {transform_indices = @transform_13, window_bounds = array<i64: 1, 8, 32>}]} {
    %c0 = arith.constant 0 : index
    %c0_0 = arith.constant 0 : index
    %c0_1 = arith.constant 0 : index
    %0 = vector.load %arg1[%c0, %c0_0, %c0_1] : memref<1x8x32xbf16, #tpu.memory_space<vmem>>, vector<1x8x32xbf16>
    %1 = vector.shape_cast %0 : vector<1x8x32xbf16> to vector<8x32xbf16>
    %2 = arith.extf %1 : vector<8x32xbf16> to vector<8x32xf32>
    %c0_2 = arith.constant 0 : index
    %c0_3 = arith.constant 0 : index
    %3 = vector.load %arg2[%c0_2, %c0_3] : memref<96x32xbf16, #tpu.memory_space<vmem>>, vector<96x32xbf16>
    %cst = arith.constant dense<0.000000e+00> : vector<8x96xf32>
    %4 = tpu.matmul %1, %3, %cst {dimension_numbers = #tpu.dot_dimension_numbers<[1], [1], [0], [0], [0, 0, 1, 0], [], []>} : vector<8x32xbf16>, vector<96x32xbf16>, vector<8x96xf32> -> vector<8x96xf32>
    %c0_4 = arith.constant 0 : index
    %c0_5 = arith.constant 0 : index
    %5 = vector.load %arg3[%c0_4, %c0_5] : memref<1x96xf32, #tpu.memory_space<vmem>>, vector<1x96xf32>
    %6 = vector.broadcast %5 : vector<1x96xf32> to vector<8x96xf32>
    %7 = arith.addf %4, %6 : vector<8x96xf32>
    %8 = vector.extract_strided_slice %7 {offsets = [0, 0], sizes = [8, 8], strides = [1, 1]} : vector<8x96xf32> to vector<8x8xf32>
    %9 = vector.extract_strided_slice %7 {offsets = [0, 32], sizes = [8, 8], strides = [1, 1]} : vector<8x96xf32> to vector<8x8xf32>
    %10 = vector.extract_strided_slice %7 {offsets = [0, 64], sizes = [8, 8], strides = [1, 1]} : vector<8x96xf32> to vector<8x8xf32>
    %11 = arith.truncf %8 : vector<8x8xf32> to vector<8x8xbf16>
    %12 = arith.truncf %9 : vector<8x8xf32> to vector<8x8xbf16>
    %cst_6 = arith.constant dense<0.000000e+00> : vector<8x8xf32>
    %13 = tpu.matmul %11, %12, %cst_6 {dimension_numbers = #tpu.dot_dimension_numbers<[1], [1], [0], [0], [0, 0, 1, 0], [], []>} : vector<8x8xbf16>, vector<8x8xbf16>, vector<8x8xf32> -> vector<8x8xf32>
    %cst_7 = arith.constant dense<0xFF800000> : vector<8xf32>
    %14 = vector.multi_reduction <maximumf>, %13, %cst_7 [1] : vector<8x8xf32> to vector<8xf32>
    %15 = vector.shape_cast %14 : vector<8xf32> to vector<8x1xf32>
    %16 = vector.broadcast %15 : vector<8x1xf32> to vector<8x8xf32>
    %17 = arith.subf %13, %16 : vector<8x8xf32>
    %18 = math.exp %17 : vector<8x8xf32>
    %cst_8 = arith.constant dense<0.000000e+00> : vector<8xf32>
    %19 = vector.multi_reduction <add>, %18, %cst_8 [1] : vector<8x8xf32> to vector<8xf32>
    %20 = vector.shape_cast %19 : vector<8xf32> to vector<8x1xf32>
    %21 = tpu.reciprocal %20 {approx = true} : vector<8x1xf32> -> vector<8x1xf32>
    %22 = vector.broadcast %21 : vector<8x1xf32> to vector<8x8xf32>
    %23 = arith.mulf %18, %22 : vector<8x8xf32>
    %24 = arith.truncf %23 : vector<8x8xf32> to vector<8x8xbf16>
    %25 = arith.truncf %10 : vector<8x8xf32> to vector<8x8xbf16>
    %cst_9 = arith.constant dense<0.000000e+00> : vector<8x8xf32>
    %26 = tpu.matmul %24, %25, %cst_9 {dimension_numbers = #tpu.dot_dimension_numbers<[1], [0], [0], [1], [0, 0, 1, 1], [], []>} : vector<8x8xbf16>, vector<8x8xbf16>, vector<8x8xf32> -> vector<8x8xf32>
    %c0_10 = arith.constant 0 : index
    %c0_11 = arith.constant 0 : index
    %27 = vector.load %arg15[%c0_10, %c0_11] : memref<8x32xf32, #tpu.memory_space<vmem>>, vector<8x8xf32>
    tpu.vector_store %arg15[%c0_10, %c0_11], %26 {strides = array<i32>} : memref<8x32xf32, #tpu.memory_space<vmem>>, vector<8x8xf32>,
    %28 = vector.extract_strided_slice %7 {offsets = [0, 8], sizes = [8, 8], strides = [1, 1]} : vector<8x96xf32> to vector<8x8xf32>
    %29 = vector.extract_strided_slice %7 {offsets = [0, 40], sizes = [8, 8], strides = [1, 1]} : vector<8x96xf32> to vector<8x8xf32>
    %30 = vector.extract_strided_slice %7 {offsets = [0, 72], sizes = [8, 8], strides = [1, 1]} : vector<8x96xf32> to vector<8x8xf32>
    %31 = arith.truncf %28 : vector<8x8xf32> to vector<8x8xbf16>
    %32 = arith.truncf %29 : vector<8x8xf32> to vector<8x8xbf16>
    %cst_12 = arith.constant dense<0.000000e+00> : vector<8x8xf32>
    %33 = tpu.matmul %31, %32, %cst_12 {dimension_numbers = #tpu.dot_dimension_numbers<[1], [1], [0], [0], [0, 0, 1, 0], [], []>} : vector<8x8xbf16>, vector<8x8xbf16>, vector<8x8xf32> -> vector<8x8xf32>
    %cst_13 = arith.constant dense<0xFF800000> : vector<8xf32>
    %34 = vector.multi_reduction <maximumf>, %33, %cst_13 [1] : vector<8x8xf32> to vector<8xf32>
    %35 = vector.shape_cast %34 : vector<8xf32> to vector<8x1xf32>
    %36 = vector.broadcast %35 : vector<8x1xf32> to vector<8x8xf32>
    %37 = arith.subf %33, %36 : vector<8x8xf32>
    %38 = math.exp %37 : vector<8x8xf32>
    %cst_14 = arith.constant dense<0.000000e+00> : vector<8xf32>
    %39 = vector.multi_reduction <add>, %38, %cst_14 [1] : vector<8x8xf32> to vector<8xf32>
    %40 = vector.shape_cast %39 : vector<8xf32> to vector<8x1xf32>
    %41 = tpu.reciprocal %40 {approx = true} : vector<8x1xf32> -> vector<8x1xf32>
    %42 = vector.broadcast %41 : vector<8x1xf32> to vector<8x8xf32>
    %43 = arith.mulf %38, %42 : vector<8x8xf32>
    %44 = arith.truncf %43 : vector<8x8xf32> to vector<8x8xbf16>
    %45 = arith.truncf %30 : vector<8x8xf32> to vector<8x8xbf16>
    %cst_15 = arith.constant dense<0.000000e+00> : vector<8x8xf32>
    %46 = tpu.matmul %44, %45, %cst_15 {dimension_numbers = #tpu.dot_dimension_numbers<[1], [0], [0], [1], [0, 0, 1, 1], [], []>} : vector<8x8xbf16>, vector<8x8xbf16>, vector<8x8xf32> -> vector<8x8xf32>
    %c0_16 = arith.constant 0 : index
    %c8 = arith.constant 8 : index
    %47 = vector.load %arg15[%c0_16, %c8] : memref<8x32xf32, #tpu.memory_space<vmem>>, vector<8x8xf32>
    tpu.vector_store %arg15[%c0_16, %c8], %46 {strides = array<i32>} : memref<8x32xf32, #tpu.memory_space<vmem>>, vector<8x8xf32>,
    %48 = vector.extract_strided_slice %7 {offsets = [0, 16], sizes = [8, 8], strides = [1, 1]} : vector<8x96xf32> to vector<8x8xf32>
    %49 = vector.extract_strided_slice %7 {offsets = [0, 48], sizes = [8, 8], strides = [1, 1]} : vector<8x96xf32> to vector<8x8xf32>
    %50 = vector.extract_strided_slice %7 {offsets = [0, 80], sizes = [8, 8], strides = [1, 1]} : vector<8x96xf32> to vector<8x8xf32>
    %51 = arith.truncf %48 : vector<8x8xf32> to vector<8x8xbf16>
    %52 = arith.truncf %49 : vector<8x8xf32> to vector<8x8xbf16>
    %cst_17 = arith.constant dense<0.000000e+00> : vector<8x8xf32>
    %53 = tpu.matmul %51, %52, %cst_17 {dimension_numbers = #tpu.dot_dimension_numbers<[1], [1], [0], [0], [0, 0, 1, 0], [], []>} : vector<8x8xbf16>, vector<8x8xbf16>, vector<8x8xf32> -> vector<8x8xf32>
    %cst_18 = arith.constant dense<0xFF800000> : vector<8xf32>
    %54 = vector.multi_reduction <maximumf>, %53, %cst_18 [1] : vector<8x8xf32> to vector<8xf32>
    %55 = vector.shape_cast %54 : vector<8xf32> to vector<8x1xf32>
    %56 = vector.broadcast %55 : vector<8x1xf32> to vector<8x8xf32>
    %57 = arith.subf %53, %56 : vector<8x8xf32>
    %58 = math.exp %57 : vector<8x8xf32>
    %cst_19 = arith.constant dense<0.000000e+00> : vector<8xf32>
    %59 = vector.multi_reduction <add>, %58, %cst_19 [1] : vector<8x8xf32> to vector<8xf32>
    %60 = vector.shape_cast %59 : vector<8xf32> to vector<8x1xf32>
    %61 = tpu.reciprocal %60 {approx = true} : vector<8x1xf32> -> vector<8x1xf32>
    %62 = vector.broadcast %61 : vector<8x1xf32> to vector<8x8xf32>
    %63 = arith.mulf %58, %62 : vector<8x8xf32>
    %64 = arith.truncf %63 : vector<8x8xf32> to vector<8x8xbf16>
    %65 = arith.truncf %50 : vector<8x8xf32> to vector<8x8xbf16>
    %cst_20 = arith.constant dense<0.000000e+00> : vector<8x8xf32>
    %66 = tpu.matmul %64, %65, %cst_20 {dimension_numbers = #tpu.dot_dimension_numbers<[1], [0], [0], [1], [0, 0, 1, 1], [], []>} : vector<8x8xbf16>, vector<8x8xbf16>, vector<8x8xf32> -> vector<8x8xf32>
    %c0_21 = arith.constant 0 : index
    %c16 = arith.constant 16 : index
    %67 = vector.load %arg15[%c0_21, %c16] : memref<8x32xf32, #tpu.memory_space<vmem>>, vector<8x8xf32>
    tpu.vector_store %arg15[%c0_21, %c16], %66 {strides = array<i32>} : memref<8x32xf32, #tpu.memory_space<vmem>>, vector<8x8xf32>,
    %68 = vector.extract_strided_slice %7 {offsets = [0, 24], sizes = [8, 8], strides = [1, 1]} : vector<8x96xf32> to vector<8x8xf32>
    %69 = vector.extract_strided_slice %7 {offsets = [0, 56], sizes = [8, 8], strides = [1, 1]} : vector<8x96xf32> to vector<8x8xf32>
    %70 = vector.extract_strided_slice %7 {offsets = [0, 88], sizes = [8, 8], strides = [1, 1]} : vector<8x96xf32> to vector<8x8xf32>
    %71 = arith.truncf %68 : vector<8x8xf32> to vector<8x8xbf16>
    %72 = arith.truncf %69 : vector<8x8xf32> to vector<8x8xbf16>
    %cst_22 = arith.constant dense<0.000000e+00> : vector<8x8xf32>
    %73 = tpu.matmul %71, %72, %cst_22 {dimension_numbers = #tpu.dot_dimension_numbers<[1], [1], [0], [0], [0, 0, 1, 0], [], []>} : vector<8x8xbf16>, vector<8x8xbf16>, vector<8x8xf32> -> vector<8x8xf32>
    %cst_23 = arith.constant dense<0xFF800000> : vector<8xf32>
    %74 = vector.multi_reduction <maximumf>, %73, %cst_23 [1] : vector<8x8xf32> to vector<8xf32>
    %75 = vector.shape_cast %74 : vector<8xf32> to vector<8x1xf32>
    %76 = vector.broadcast %75 : vector<8x1xf32> to vector<8x8xf32>
    %77 = arith.subf %73, %76 : vector<8x8xf32>
    %78 = math.exp %77 : vector<8x8xf32>
    %cst_24 = arith.constant dense<0.000000e+00> : vector<8xf32>
    %79 = vector.multi_reduction <add>, %78, %cst_24 [1] : vector<8x8xf32> to vector<8xf32>
    %80 = vector.shape_cast %79 : vector<8xf32> to vector<8x1xf32>
    %81 = tpu.reciprocal %80 {approx = true} : vector<8x1xf32> -> vector<8x1xf32>
    %82 = vector.broadcast %81 : vector<8x1xf32> to vector<8x8xf32>
    %83 = arith.mulf %78, %82 : vector<8x8xf32>
    %84 = arith.truncf %83 : vector<8x8xf32> to vector<8x8xbf16>
    %85 = arith.truncf %70 : vector<8x8xf32> to vector<8x8xbf16>
    %cst_25 = arith.constant dense<0.000000e+00> : vector<8x8xf32>
    %86 = tpu.matmul %84, %85, %cst_25 {dimension_numbers = #tpu.dot_dimension_numbers<[1], [0], [0], [1], [0, 0, 1, 1], [], []>} : vector<8x8xbf16>, vector<8x8xbf16>, vector<8x8xf32> -> vector<8x8xf32>
    %c0_26 = arith.constant 0 : index
    %c24 = arith.constant 24 : index
    %87 = vector.load %arg15[%c0_26, %c24] : memref<8x32xf32, #tpu.memory_space<vmem>>, vector<8x8xf32>
    tpu.vector_store %arg15[%c0_26, %c24], %86 {strides = array<i32>} : memref<8x32xf32, #tpu.memory_space<vmem>>, vector<8x8xf32>,
    %c0_27 = arith.constant 0 : index
    %c0_28 = arith.constant 0 : index
    %88 = vector.load %arg15[%c0_27, %c0_28] : memref<8x32xf32, #tpu.memory_space<vmem>>, vector<8x32xf32>
    %89 = arith.truncf %88 : vector<8x32xf32> to vector<8x32xbf16>
    %c0_29 = arith.constant 0 : index
    %c0_30 = arith.constant 0 : index
    %90 = vector.load %arg4[%c0_29, %c0_30] : memref<32x32xbf16, #tpu.memory_space<vmem>>, vector<32x32xbf16>
    %cst_31 = arith.constant dense<0.000000e+00> : vector<8x32xf32>
    %91 = tpu.matmul %89, %90, %cst_31 {dimension_numbers = #tpu.dot_dimension_numbers<[1], [1], [0], [0], [0, 0, 1, 0], [], []>} : vector<8x32xbf16>, vector<32x32xbf16>, vector<8x32xf32> -> vector<8x32xf32>
    %c0_32 = arith.constant 0 : index
    %c0_33 = arith.constant 0 : index
    %92 = vector.load %arg5[%c0_32, %c0_33] : memref<1x32xf32, #tpu.memory_space<vmem>>, vector<1x32xf32>
    %93 = vector.broadcast %92 : vector<1x32xf32> to vector<8x32xf32>
    %94 = arith.addf %91, %93 : vector<8x32xf32>
    %95 = arith.addf %2, %94 : vector<8x32xf32>
    %cst_34 = arith.constant dense<0.000000e+00> : vector<8xf32>
    %96 = vector.multi_reduction <add>, %95, %cst_34 [1] : vector<8x32xf32> to vector<8xf32>
    %97 = vector.shape_cast %96 : vector<8xf32> to vector<8x1xf32>
    %cst_35 = arith.constant 3.200000e+01 : f32
    %98 = vector.broadcast %cst_35 : f32 to vector<8x1xf32>
    %99 = arith.divf %97, %98 : vector<8x1xf32>
    %100 = vector.broadcast %99 : vector<8x1xf32> to vector<8x32xf32>
    %101 = arith.subf %95, %100 : vector<8x32xf32>
    %102 = arith.mulf %101, %101 : vector<8x32xf32>
    %cst_36 = arith.constant dense<0.000000e+00> : vector<8xf32>
    %103 = vector.multi_reduction <add>, %102, %cst_36 [1] : vector<8x32xf32> to vector<8xf32>
    %104 = vector.shape_cast %103 : vector<8xf32> to vector<8x1xf32>
    %cst_37 = arith.constant 3.200000e+01 : f32
    %105 = vector.broadcast %cst_37 : f32 to vector<8x1xf32>
    %106 = arith.divf %104, %105 : vector<8x1xf32>
    %107 = vector.broadcast %99 : vector<8x1xf32> to vector<8x32xf32>
    %108 = arith.subf %95, %107 : vector<8x32xf32>
    %cst_38 = arith.constant 9.99999974E-6 : f32
    %109 = vector.broadcast %cst_38 : f32 to vector<8x1xf32>
    %110 = arith.addf %106, %109 : vector<8x1xf32>
    %111 = math.rsqrt %110 : vector<8x1xf32>
    %112 = vector.broadcast %111 : vector<8x1xf32> to vector<8x32xf32>
    %113 = arith.mulf %108, %112 : vector<8x32xf32>
    %c0_39 = arith.constant 0 : index
    %c0_40 = arith.constant 0 : index
    %114 = vector.load %arg6[%c0_39, %c0_40] : memref<1x32xf32, #tpu.memory_space<vmem>>, vector<1x32xf32>
    %115 = vector.broadcast %114 : vector<1x32xf32> to vector<8x32xf32>
    %116 = arith.mulf %113, %115 : vector<8x32xf32>
    %c0_41 = arith.constant 0 : index
    %c0_42 = arith.constant 0 : index
    %117 = vector.load %arg7[%c0_41, %c0_42] : memref<1x32xf32, #tpu.memory_space<vmem>>, vector<1x32xf32>
    %118 = vector.broadcast %117 : vector<1x32xf32> to vector<8x32xf32>
    %119 = arith.addf %116, %118 : vector<8x32xf32>
    %120 = arith.truncf %119 : vector<8x32xf32> to vector<8x32xbf16>
    %c0_43 = arith.constant 0 : index
    %c0_44 = arith.constant 0 : index
    %121 = vector.load %arg8[%c0_43, %c0_44] : memref<64x32xbf16, #tpu.memory_space<vmem>>, vector<64x32xbf16>
    %cst_45 = arith.constant dense<0.000000e+00> : vector<8x64xf32>
    %122 = tpu.matmul %120, %121, %cst_45 {dimension_numbers = #tpu.dot_dimension_numbers<[1], [1], [0], [0], [0, 0, 1, 0], [], []>} : vector<8x32xbf16>, vector<64x32xbf16>, vector<8x64xf32> -> vector<8x64xf32>
    %c0_46 = arith.constant 0 : index
    %c0_47 = arith.constant 0 : index
    %123 = vector.load %arg9[%c0_46, %c0_47] : memref<1x64xf32, #tpu.memory_space<vmem>>, vector<1x64xf32>
    %124 = vector.broadcast %123 : vector<1x64xf32> to vector<8x64xf32>
    %125 = arith.addf %122, %124 : vector<8x64xf32>
    %cst_48 = arith.constant 0.000000e+00 : f32
    %126 = vector.broadcast %cst_48 : f32 to vector<8x64xf32>
    %127 = arith.maximumf %125, %126 : vector<8x64xf32>
    %128 = arith.truncf %127 : vector<8x64xf32> to vector<8x64xbf16>
    %c0_49 = arith.constant 0 : index
    %c0_50 = arith.constant 0 : index
    %129 = vector.load %arg10[%c0_49, %c0_50] : memref<32x64xbf16, #tpu.memory_space<vmem>>, vector<32x64xbf16>
    %cst_51 = arith.constant dense<0.000000e+00> : vector<8x32xf32>
    %130 = tpu.matmul %128, %129, %cst_51 {dimension_numbers = #tpu.dot_dimension_numbers<[1], [1], [0], [0], [0, 0, 1, 0], [], []>} : vector<8x64xbf16>, vector<32x64xbf16>, vector<8x32xf32> -> vector<8x32xf32>
    %c0_52 = arith.constant 0 : index
    %c0_53 = arith.constant 0 : index
    %131 = vector.load %arg11[%c0_52, %c0_53] : memref<1x32xf32, #tpu.memory_space<vmem>>, vector<1x32xf32>
    %132 = vector.broadcast %131 : vector<1x32xf32> to vector<8x32xf32>
    %133 = arith.addf %130, %132 : vector<8x32xf32>
    %134 = arith.addf %119, %133 : vector<8x32xf32>
    %cst_54 = arith.constant dense<0.000000e+00> : vector<8xf32>
    %135 = vector.multi_reduction <add>, %134, %cst_54 [1] : vector<8x32xf32> to vector<8xf32>
    %136 = vector.shape_cast %135 : vector<8xf32> to vector<8x1xf32>
    %cst_55 = arith.constant 3.200000e+01 : f32
    %137 = vector.broadcast %cst_55 : f32 to vector<8x1xf32>
    %138 = arith.divf %136, %137 : vector<8x1xf32>
    %139 = vector.broadcast %138 : vector<8x1xf32> to vector<8x32xf32>
    %140 = arith.subf %134, %139 : vector<8x32xf32>
    %141 = arith.mulf %140, %140 : vector<8x32xf32>
    %cst_56 = arith.constant dense<0.000000e+00> : vector<8xf32>
    %142 = vector.multi_reduction <add>, %141, %cst_56 [1] : vector<8x32xf32> to vector<8xf32>
    %143 = vector.shape_cast %142 : vector<8xf32> to vector<8x1xf32>
    %cst_57 = arith.constant 3.200000e+01 : f32
    %144 = vector.broadcast %cst_57 : f32 to vector<8x1xf32>
    %145 = arith.divf %143, %144 : vector<8x1xf32>
    %146 = vector.broadcast %138 : vector<8x1xf32> to vector<8x32xf32>
    %147 = arith.subf %134, %146 : vector<8x32xf32>
    %cst_58 = arith.constant 9.99999974E-6 : f32
    %148 = vector.broadcast %cst_58 : f32 to vector<8x1xf32>
    %149 = arith.addf %145, %148 : vector<8x1xf32>
    %150 = math.rsqrt %149 : vector<8x1xf32>
    %151 = vector.broadcast %150 : vector<8x1xf32> to vector<8x32xf32>
    %152 = arith.mulf %147, %151 : vector<8x32xf32>
    %c0_59 = arith.constant 0 : index
    %c0_60 = arith.constant 0 : index
    %153 = vector.load %arg12[%c0_59, %c0_60] : memref<1x32xf32, #tpu.memory_space<vmem>>, vector<1x32xf32>
    %154 = vector.broadcast %153 : vector<1x32xf32> to vector<8x32xf32>
    %155 = arith.mulf %152, %154 : vector<8x32xf32>
    %c0_61 = arith.constant 0 : index
    %c0_62 = arith.constant 0 : index
    %156 = vector.load %arg13[%c0_61, %c0_62] : memref<1x32xf32, #tpu.memory_space<vmem>>, vector<1x32xf32>
    %157 = vector.broadcast %156 : vector<1x32xf32> to vector<8x32xf32>
    %158 = arith.addf %155, %157 : vector<8x32xf32>
    %159 = arith.truncf %158 : vector<8x32xf32> to vector<8x32xbf16>
    %c0_63 = arith.constant 0 : index
    %c0_64 = arith.constant 0 : index
    %c0_65 = arith.constant 0 : index
    %160 = vector.load %arg14[%c0_63, %c0_64, %c0_65] : memref<1x8x32xbf16, #tpu.memory_space<vmem>>, vector<1x8x32xbf16>
    %161 = vector.shape_cast %160 : vector<1x8x32xbf16> to vector<8x32xbf16>
    %162 = vector.shape_cast %159 : vector<8x32xbf16> to vector<1x8x32xbf16>
    tpu.vector_store %arg14[%c0_63, %c0_64, %c0_65], %162 {strides = array<i32>} : memref<1x8x32xbf16, #tpu.memory_space<vmem>>, vector<1x8x32xbf16>,
    return
  }
  func.func @transform_0(%arg0: i32) -> (i32, i32, i32) {
    %c0_i32 = arith.constant 0 : i32
    %c0_i32_0 = arith.constant 0 : i32
    %c0_i32_1 = arith.constant 0 : i32
    return %arg0, %c0_i32, %c0_i32_0 : i32, i32, i32
  }
  func.func @transform_1(%arg0: i32) -> (i32, i32) {
    %c0_i32 = arith.constant 0 : i32
    %c0_i32_0 = arith.constant 0 : i32
    %c0_i32_1 = arith.constant 0 : i32
    return %c0_i32, %c0_i32_0 : i32, i32
  }
  func.func @transform_2(%arg0: i32) -> (i32, i32) {
    %c0_i32 = arith.constant 0 : i32
    %c0_i32_0 = arith.constant 0 : i32
    %c0_i32_1 = arith.constant 0 : i32
    return %c0_i32, %c0_i32_0 : i32, i32
  }
  func.func @transform_3(%arg0: i32) -> (i32, i32) {
    %c0_i32 = arith.constant 0 : i32
    %c0_i32_0 = arith.constant 0 : i32
    %c0_i32_1 = arith.constant 0 : i32
    return %c0_i32, %c0_i32_0 : i32, i32
  }
  func.func @transform_4(%arg0: i32) -> (i32, i32) {
    %c0_i32 = arith.constant 0 : i32
    %c0_i32_0 = arith.constant 0 : i32
    %c0_i32_1 = arith.constant 0 : i32
    return %c0_i32, %c0_i32_0 : i32, i32
  }
  func.func @transform_5(%arg0: i32) -> (i32, i32) {
    %c0_i32 = arith.constant 0 : i32
    %c0_i32_0 = arith.constant 0 : i32
    %c0_i32_1 = arith.constant 0 : i32
    return %c0_i32, %c0_i32_0 : i32, i32
  }
  func.func @transform_6(%arg0: i32) -> (i32, i32) {
    %c0_i32 = arith.constant 0 : i32
    %c0_i32_0 = arith.constant 0 : i32
    %c0_i32_1 = arith.constant 0 : i32
    return %c0_i32, %c0_i32_0 : i32, i32
  }
  func.func @transform_7(%arg0: i32) -> (i32, i32) {
    %c0_i32 = arith.constant 0 : i32
    %c0_i32_0 = arith.constant 0 : i32
    %c0_i32_1 = arith.constant 0 : i32
    return %c0_i32, %c0_i32_0 : i32, i32
  }
  func.func @transform_8(%arg0: i32) -> (i32, i32) {
    %c0_i32 = arith.constant 0 : i32
    %c0_i32_0 = arith.constant 0 : i32
    %c0_i32_1 = arith.constant 0 : i32
    return %c0_i32, %c0_i32_0 : i32, i32
  }
  func.func @transform_9(%arg0: i32) -> (i32, i32) {
    %c0_i32 = arith.constant 0 : i32
    %c0_i32_0 = arith.constant 0 : i32
    %c0_i32_1 = arith.constant 0 : i32
    return %c0_i32, %c0_i32_0 : i32, i32
  }
  func.func @transform_10(%arg0: i32) -> (i32, i32) {
    %c0_i32 = arith.constant 0 : i32
    %c0_i32_0 = arith.constant 0 : i32
    %c0_i32_1 = arith.constant 0 : i32
    return %c0_i32, %c0_i32_0 : i32, i32
  }
  func.func @transform_11(%arg0: i32) -> (i32, i32) {
    %c0_i32 = arith.constant 0 : i32
    %c0_i32_0 = arith.constant 0 : i32
    %c0_i32_1 = arith.constant 0 : i32
    return %c0_i32, %c0_i32_0 : i32, i32
  }
  func.func @transform_12(%arg0: i32) -> (i32, i32) {
    %c0_i32 = arith.constant 0 : i32
    %c0_i32_0 = arith.constant 0 : i32
    %c0_i32_1 = arith.constant 0 : i32
    return %c0_i32, %c0_i32_0 : i32, i32
  }
  func.func @transform_13(%arg0: i32) -> (i32, i32, i32) {
    %c0_i32 = arith.constant 0 : i32
    %c0_i32_0 = arith.constant 0 : i32
    %c0_i32_1 = arith.constant 0 : i32
    return %arg0, %c0_i32, %c0_i32_0 : i32, i32, i32
  }
}

</mosaic_0001>

<llo_original>
// kernel: tpu_custom_call.1
$region0: #{tpu_custom_call.1}
  #allocation0 [shape = 'u32[]', space=smem, size = 0x4, offset = 0x4, fixed_abs, tag = 'smem constant byte address 0x4 - core index']
  #allocation1 [shape = 'u32[144,128]{1,0:T(1,128)}', space=vmem, size = 0x12000, scoped, tag = 'internal scratch']
  %s0 = inlined_call_operand.hbm [shape: f32[8,128], index: 0, kind: input, shape index: {}]
  %s1 = inlined_call_operand.hbm [shape: f32[8,128], index: 1, kind: output, shape index: {}]
  %s2 = sld [smem:[#allocation0]]
  $region41: #{tpu_custom_call.1} parent=0
    _
  %s4 = ssub.s32 1, %s2
  %s5 = scalar_select 0, %s4, %s2
  $region1: #{tpu_custom_call.1} parent=0
    #allocation2 [shape = 'u8[4096]{0}', space=vmem, size = 0x1000, scoped, tag = 'input window, operand 0, single buffered']
    #allocation3 [shape = 's32[2]{0}', space=sflag, size = 0x8, scoped, tag = 'scoped memory for tpu_custom_call.1']
    #allocation4 [shape = 's32[2]{0}', space=sflag, size = 0x8, scoped, tag = 'scoped memory for tpu_custom_call.1']
    #allocation5 [shape = 'u8[4096]{0}', space=vmem, size = 0x1000, scoped, tag = 'output window, operand 0, single buffered']
    %6 = vsyncpa [#allocation3], 0
    %7 = vsyncpa [#allocation4], 0
    loop: start=0, step=1, limit=4
    $region2: #{tpu_custom_call.1} parent=1 // loop_pre_header
      _
    $region3: #{tpu_custom_call.1} parent=1 // loop_header
      %s9 = sphi 0, %s13
      %p10 = scmp.ge.s32.totalorder %s9, 4
      %s17 = sphi 0, %s17
      %s19 = sphi 0, %s17
      %s20 = sphi 0, %s19
      %s34 = sphi 0, %s20
      %s38 = sphi 0, %s38
      %s40 = sphi 0, %s38
      %s41 = sphi 0, %s40
      %s55 = sphi 0, %s41
    $region4: #{tpu_custom_call.1} parent=1 // loop_header_branch
      %12 = sbr.rel (%p10) target = $region8
    $region5: #{tpu_custom_call.1} parent=1 // loop_body
      %s14 = ssub.s32 %s9, 1
      %s15 = ssub.s32 %s9, 2
      %s16 = sadd.s32 %s9, 1
      %s18 = sadd.s32 %s17, 1
      %p21 = scmp.eq.s32.totalorder %s9, 1
      %p22 = scmp.ne.s32.totalorder %s17, %s19
      %p23 = scmp.eq.s32.totalorder %s9, 0
      %p24 = por %p22, %p23
      %p25 = scmp.ne.s32.totalorder %s17, %s19
      %p26 = scmp.eq.s32.totalorder %s14, 1
      %p27 = por %p25, %p26
      %p28 = scmp.ne.s32.totalorder %s19, %s20
      %p29 = scmp.eq.s32.totalorder %s14, 0
      %p30 = por %p28, %p29
      %p31 = scmp.ne.s32.totalorder %s19, %s20
      %p32 = scmp.eq.s32.totalorder %s15, 1
      %p33 = por %p31, %p32
      %p35 = scmp.ne.s32.totalorder %s20, %s34
      %p36 = scmp.eq.s32.totalorder %s15, 0
      %p37 = por %p35, %p36
      %s39 = sadd.s32 %s38, 1
      %p42 = scmp.eq.s32.totalorder %s9, 1
      %p43 = scmp.ne.s32.totalorder %s38, %s40
      %p44 = scmp.eq.s32.totalorder %s9, 0
      %p45 = por %p43, %p44
      %p46 = scmp.ne.s32.totalorder %s38, %s40
      %p47 = scmp.eq.s32.totalorder %s14, 1
      %p48 = por %p46, %p47
      %p49 = scmp.ne.s32.totalorder %s40, %s41
      %p50 = scmp.eq.s32.totalorder %s14, 0
      %p51 = por %p49, %p50
      %p52 = scmp.ne.s32.totalorder %s40, %s41
      %p53 = scmp.eq.s32.totalorder %s15, 1
      %p54 = por %p52, %p53
      %p56 = scmp.ne.s32.totalorder %s41, %s55
      %p57 = scmp.eq.s32.totalorder %s15, 0
      %p58 = por %p56, %p57
      %p59 = scmp.le.s32.totalorder 1, %s9
      %p60 = scmp.lt.s32.totalorder %s9, 3
      %p61 = pnand %p59, %p60
      %p62 = pneg %p61
      // Predicated region
      $region9: #{tpu_custom_call.1} parent=5 // pred_check
        _
      $region10: #{tpu_custom_call.1} parent=5 // pred_check_branch
        %64 = sbr.rel (%p61) target = $region12
      $region11: #{tpu_custom_call.1} parent=5 // pred_region
        %s65 = ssub.s32 %s9, 1
        // Predicated region
        $region13: #{tpu_custom_call.1} parent=11 // pred_check
          %p66 = pneg %p30
        $region14: #{tpu_custom_call.1} parent=11 // pred_check_branch
          %68 = sbr.rel (%p66) target = $region16
        $region15: #{tpu_custom_call.1} parent=11 // pred_region
          %s70 = ssub.s32 128, 128
          %71 = vsyncadd [#allocation3], %s70
          %s73 = sshll.u32 [#allocation2], 4
          %s74 = int_to_ptr.vmem [resolvable:$true] %s73
          %76 = dma.hbm_to_vmem [thread:$0]  %s0, 128, %s74, [#allocation3]
        $region16: #{tpu_custom_call.1} parent=11 // pred_fallthru
          _
      $region12: #{tpu_custom_call.1} parent=5 // pred_fallthru
        _
      %p77 = scmp.lt.s32.totalorder %s9, 2
      // Predicated region
      $region17: #{tpu_custom_call.1} parent=5 // pred_check
        %p78 = pneg %p77
      $region18: #{tpu_custom_call.1} parent=5 // pred_check_branch
        %80 = sbr.rel (%p78) target = $region20
      $region19: #{tpu_custom_call.1} parent=5 // pred_region
        _
      $region20: #{tpu_custom_call.1} parent=5 // pred_fallthru
        _
      %p81 = scmp.le.s32.totalorder 1, %s9
      %p82 = scmp.lt.s32.totalorder %s9, 3
      %p83 = pnand %p81, %p82
      %p84 = pneg %p83
      // Predicated region
      $region21: #{tpu_custom_call.1} parent=5 // pred_check
        _
      $region22: #{tpu_custom_call.1} parent=5 // pred_check_branch
        %86 = sbr.rel (%p83) target = $region24
      $region23: #{tpu_custom_call.1} parent=5 // pred_region
        %s87 = ssub.s32 %s9, 1
        // Predicated region
        $region25: #{tpu_custom_call.1} parent=23 // pred_check
          %p88 = pneg %p30
        $region26: #{tpu_custom_call.1} parent=23 // pred_check_branch
          %90 = sbr.rel (%p88) target = $region28
        $region27: #{tpu_custom_call.1} parent=23 // pred_region
          %91 = dma.done [#allocation3], 128
        $region28: #{tpu_custom_call.1} parent=23 // pred_fallthru
          _
        %p92 = pneg %p30
        %p93 = pneg %p27
        %p94 = pneg %p51
        %p95 = pneg %p48
        %v96 = vld [vmem:[#allocation2] sm:$0xff]
        %v97 = vadd.f32 %v96, 1.0
        %98 = vst [vmem:[#allocation5] sm:$0xff] %v97
        // Predicated region
        $region29: #{tpu_custom_call.1} parent=23 // pred_check
          %p99 = pneg %p48
        $region30: #{tpu_custom_call.1} parent=23 // pred_check_branch
          %101 = sbr.rel (%p99) target = $region32
        $region31: #{tpu_custom_call.1} parent=23 // pred_region
          %s103 = ssub.s32 128, 128
          %104 = vsyncadd [#allocation4], %s103
          %s106 = sshll.u32 [#allocation5], 4
          %s107 = int_to_ptr.vmem [resolvable:$true] %s106
          %109 = dma.vmem_to_hbm [thread:$0]  %s107, 128, %s1, [#allocation4]
        $region32: #{tpu_custom_call.1} parent=23 // pred_fallthru
          _
        // Predicated region
        $region33: #{tpu_custom_call.1} parent=23 // pred_check
          %p110 = pneg %p48
        $region34: #{tpu_custom_call.1} parent=23 // pred_check_branch
          %112 = sbr.rel (%p110) target = $region36
        $region35: #{tpu_custom_call.1} parent=23 // pred_region
          %113 = dma.done [#allocation4], 128
        $region36: #{tpu_custom_call.1} parent=23 // pred_fallthru
          _
      $region24: #{tpu_custom_call.1} parent=5 // pred_fallthru
        _
      %p114 = scmp.le.s32.totalorder 2, %s9
      // Predicated region
      $region37: #{tpu_custom_call.1} parent=5 // pred_check
        %p115 = pneg %p114
      $region38: #{tpu_custom_call.1} parent=5 // pred_check_branch
        %117 = sbr.rel (%p115) target = $region40
      $region39: #{tpu_custom_call.1} parent=5 // pred_region
        %s118 = ssub.s32 %s9, 2
      $region40: #{tpu_custom_call.1} parent=5 // pred_fallthru
        _
    $region6: #{tpu_custom_call.1} parent=1 // loop_footer
      %s13 = sadd.s32 1, %s9
    $region7: #{tpu_custom_call.1} parent=1 // loop_footer_branch
      %8 = sbr.rel target = $region3
    $region8: #{tpu_custom_call.1} parent=1 // loop_exit
      _
    %119 = vsyncpa [#allocation3], 1
    %s120 = scalar_lea.sflag [#allocation3], 1
    %121 = vsyncpa %s120, 1
    %122 = vsyncpa [#allocation4], 1
    %s123 = scalar_lea.sflag [#allocation4], 1
    %124 = vsyncpa %s123, 1

// kernel: puretran_forward.4
$region0: #{puretran_forward.4}
  #allocation0 [shape = 'u32[]', space=smem, size = 0x4, offset = 0x4, fixed_abs, tag = 'smem constant byte address 0x4 - core index']
  #allocation1 [shape = 'u32[144,128]{1,0:T(1,128)}', space=vmem, size = 0x12000, scoped, tag = 'internal scratch']
  %s0 = inlined_call_operand.vmem [shape: f32[32,8], index: 0, kind: input, shape index: {}]
  %s1 = inlined_call_operand.vmem [shape: bf16[8,8], index: 1, kind: input, shape index: {}]
  %s2 = inlined_call_operand.vmem [shape: f32[1,8], index: 2, kind: input, shape index: {}]
  %s3 = inlined_call_operand.vmem [shape: bf16[32,8], index: 3, kind: input, shape index: {}]
  %s4 = inlined_call_operand.vmem [shape: f32[1,32], index: 4, kind: input, shape index: {}]
  %s5 = inlined_call_operand.vmem [shape: bf16[32,32], index: 5, kind: output, shape index: {}]
  %s6 = sld [smem:[#allocation0]]
  $region53: #{puretran_forward.4} parent=0
    _
  %s8 = ssub.s32 1, %s6
  %s9 = scalar_select 0, %s8, %s6
  loop: start=0, step=1, limit=4
  $region2: #{puretran_forward.4} parent=0 // loop_pre_header
    _
  $region3: #{puretran_forward.4} parent=0 // loop_header
    %s11 = sphi 0, %s15
    %p12 = scmp.ge.s32.totalorder %s11, 4
    %s21 = sphi 0, %s23
    %s24 = sphi 0, %s21
    %s25 = sphi 0, %s24
    %s41 = sphi 0, %s25
    %s45 = sphi 0, %s45
    %s47 = sphi 0, %s45
    %s48 = sphi 0, %s47
    %s62 = sphi 0, %s48
    %s66 = sphi 0, %s66
    %s68 = sphi 0, %s66
    %s69 = sphi 0, %s68
    %s83 = sphi 0, %s69
    %s87 = sphi 0, %s87
    %s89 = sphi 0, %s87
    %s90 = sphi 0, %s89
    %s104 = sphi 0, %s90
    %s108 = sphi 0, %s108
    %s110 = sphi 0, %s108
    %s111 = sphi 0, %s110
    %s125 = sphi 0, %s111
    %s131 = sphi 0, %s133
    %s134 = sphi 0, %s131
    %s135 = sphi 0, %s134
    %s151 = sphi 0, %s135
  $region4: #{puretran_forward.4} parent=0 // loop_header_branch
    %14 = sbr.rel (%p12) target = $region8
  $region5: #{puretran_forward.4} parent=0 // loop_body
    %s16 = ssub.s32 %s11, 1
    %s17 = ssub.s32 %s11, 2
    %s18 = sadd.s32 %s11, 1
    %s19 = ssub.s32 %s11, %s18
    %p20 = scmp.eq.s32.totalorder %s19, 0
    %s22 = sadd.s32 %s21, 1
    %s23 = scalar_select %p20, %s21, %s22
    %p26 = pneg %p20
    %p27 = scmp.eq.s32.totalorder %s11, 1
    %p28 = por %p26, %p27
    %p29 = scmp.ne.s32.totalorder %s21, %s24
    %p30 = scmp.eq.s32.totalorder %s11, 0
    %p31 = por %p29, %p30
    %p32 = scmp.ne.s32.totalorder %s21, %s24
    %p33 = scmp.eq.s32.totalorder %s16, 1
    %p34 = por %p32, %p33
    %p35 = scmp.ne.s32.totalorder %s24, %s25
    %p36 = scmp.eq.s32.totalorder %s16, 0
    %p37 = por %p35, %p36
    %p38 = scmp.ne.s32.totalorder %s24, %s25
    %p39 = scmp.eq.s32.totalorder %s17, 1
    %p40 = por %p38, %p39
    %p42 = scmp.ne.s32.totalorder %s25, %s41
    %p43 = scmp.eq.s32.totalorder %s17, 0
    %p44 = por %p42, %p43
    %s46 = sadd.s32 %s45, 1
    %p49 = scmp.eq.s32.totalorder %s11, 1
    %p50 = scmp.ne.s32.totalorder %s45, %s47
    %p51 = scmp.eq.s32.totalorder %s11, 0
    %p52 = por %p50, %p51
    %p53 = scmp.ne.s32.totalorder %s45, %s47
    %p54 = scmp.eq.s32.totalorder %s16, 1
    %p55 = por %p53, %p54
    %p56 = scmp.ne.s32.totalorder %s47, %s48
    %p57 = scmp.eq.s32.totalorder %s16, 0
    %p58 = por %p56, %p57
    %p59 = scmp.ne.s32.totalorder %s47, %s48
    %p60 = scmp.eq.s32.totalorder %s17, 1
    %p61 = por %p59, %p60
    %p63 = scmp.ne.s32.totalorder %s48, %s62
    %p64 = scmp.eq.s32.totalorder %s17, 0
    %p65 = por %p63, %p64
    %s67 = sadd.s32 %s66, 1
    %p70 = scmp.eq.s32.totalorder %s11, 1
    %p71 = scmp.ne.s32.totalorder %s66, %s68
    %p72 = scmp.eq.s32.totalorder %s11, 0
    %p73 = por %p71, %p72
    %p74 = scmp.ne.s32.totalorder %s66, %s68
    %p75 = scmp.eq.s32.totalorder %s16, 1
    %p76 = por %p74, %p75
    %p77 = scmp.ne.s32.totalorder %s68, %s69
    %p78 = scmp.eq.s32.totalorder %s16, 0
    %p79 = por %p77, %p78
    %p80 = scmp.ne.s32.totalorder %s68, %s69
    %p81 = scmp.eq.s32.totalorder %s17, 1
    %p82 = por %p80, %p81
    %p84 = scmp.ne.s32.totalorder %s69, %s83
    %p85 = scmp.eq.s32.totalorder %s17, 0
    %p86 = por %p84, %p85
    %s88 = sadd.s32 %s87, 1
    %p91 = scmp.eq.s32.totalorder %s11, 1
    %p92 = scmp.ne.s32.totalorder %s87, %s89
    %p93 = scmp.eq.s32.totalorder %s11, 0
    %p94 = por %p92, %p93
    %p95 = scmp.ne.s32.totalorder %s87, %s89
    %p96 = scmp.eq.s32.totalorder %s16, 1
    %p97 = por %p95, %p96
    %p98 = scmp.ne.s32.totalorder %s89, %s90
    %p99 = scmp.eq.s32.totalorder %s16, 0
    %p100 = por %p98, %p99
    %p101 = scmp.ne.s32.totalorder %s89, %s90
    %p102 = scmp.eq.s32.totalorder %s17, 1
    %p103 = por %p101, %p102
    %p105 = scmp.ne.s32.totalorder %s90, %s104
    %p106 = scmp.eq.s32.totalorder %s17, 0
    %p107 = por %p105, %p106
    %s109 = sadd.s32 %s108, 1
    %p112 = scmp.eq.s32.totalorder %s11, 1
    %p113 = scmp.ne.s32.totalorder %s108, %s110
    %p114 = scmp.eq.s32.totalorder %s11, 0
    %p115 = por %p113, %p114
    %p116 = scmp.ne.s32.totalorder %s108, %s110
    %p117 = scmp.eq.s32.totalorder %s16, 1
    %p118 = por %p116, %p117
    %p119 = scmp.ne.s32.totalorder %s110, %s111
    %p120 = scmp.eq.s32.totalorder %s16, 0
    %p121 = por %p119, %p120
    %p122 = scmp.ne.s32.totalorder %s110, %s111
    %p123 = scmp.eq.s32.totalorder %s17, 1
    %p124 = por %p122, %p123
    %p126 = scmp.ne.s32.totalorder %s111, %s125
    %p127 = scmp.eq.s32.totalorder %s17, 0
    %p128 = por %p126, %p127
    %s129 = ssub.s32 %s11, %s18
    %p130 = scmp.eq.s32.totalorder %s129, 0
    %s132 = sadd.s32 %s131, 1
    %s133 = scalar_select %p130, %s131, %s132
    %p136 = pneg %p130
    %p137 = scmp.eq.s32.totalorder %s11, 1
    %p138 = por %p136, %p137
    %p139 = scmp.ne.s32.totalorder %s131, %s134
    %p140 = scmp.eq.s32.totalorder %s11, 0
    %p141 = por %p139, %p140
    %p142 = scmp.ne.s32.totalorder %s131, %s134
    %p143 = scmp.eq.s32.totalorder %s16, 1
    %p144 = por %p142, %p143
    %p145 = scmp.ne.s32.totalorder %s134, %s135
    %p146 = scmp.eq.s32.totalorder %s16, 0
    %p147 = por %p145, %p146
    %p148 = scmp.ne.s32.totalorder %s134, %s135
    %p149 = scmp.eq.s32.totalorder %s17, 1
    %p150 = por %p148, %p149
    %p152 = scmp.ne.s32.totalorder %s135, %s151
    %p153 = scmp.eq.s32.totalorder %s17, 0
    %p154 = por %p152, %p153
    %p155 = scmp.le.s32.totalorder 1, %s11
    %p156 = scmp.lt.s32.totalorder %s11, 3
    %p157 = pnand %p155, %p156
    %p158 = pneg %p157
    // Predicated region
    $region9: #{puretran_forward.4} parent=5 // pred_check
      _
    $region10: #{puretran_forward.4} parent=5 // pred_check_branch
      %160 = sbr.rel (%p157) target = $region12
    $region11: #{puretran_forward.4} parent=5 // pred_region
      %s161 = ssub.s32 %s11, 1
      // Predicated region
      $region13: #{puretran_forward.4} parent=11 // pred_check
        %p162 = pneg %p58
      $region14: #{puretran_forward.4} parent=11 // pred_check_branch
        %164 = sbr.rel (%p162) target = $region16
      $region15: #{puretran_forward.4} parent=11 // pred_region
        _
      $region16: #{puretran_forward.4} parent=11 // pred_fallthru
        _
      // Predicated region
      $region17: #{puretran_forward.4} parent=11 // pred_check
        %p165 = pneg %p79
      $region18: #{puretran_forward.4} parent=11 // pred_check_branch
        %167 = sbr.rel (%p165) target = $region20
      $region19: #{puretran_forward.4} parent=11 // pred_region
        _
      $region20: #{puretran_forward.4} parent=11 // pred_fallthru
        _
      // Predicated region
      $region21: #{puretran_forward.4} parent=11 // pred_check
        %p168 = pneg %p100
      $region22: #{puretran_forward.4} parent=11 // pred_check_branch
        %170 = sbr.rel (%p168) target = $region24
      $region23: #{puretran_forward.4} parent=11 // pred_region
        _
      $region24: #{puretran_forward.4} parent=11 // pred_fallthru
        _
      // Predicated region
      $region25: #{puretran_forward.4} parent=11 // pred_check
        %p171 = pneg %p121
      $region26: #{puretran_forward.4} parent=11 // pred_check_branch
        %173 = sbr.rel (%p171) target = $region28
      $region27: #{puretran_forward.4} parent=11 // pred_region
        _
      $region28: #{puretran_forward.4} parent=11 // pred_fallthru
        _
    $region12: #{puretran_forward.4} parent=5 // pred_fallthru
      _
    %p174 = scmp.lt.s32.totalorder %s11, 2
    // Predicated region
    $region29: #{puretran_forward.4} parent=5 // pred_check
      %p175 = pneg %p174
    $region30: #{puretran_forward.4} parent=5 // pred_check_branch
      %177 = sbr.rel (%p175) target = $region32
    $region31: #{puretran_forward.4} parent=5 // pred_region
      // Predicated region
      $region33: #{puretran_forward.4} parent=31 // pred_check
        %p178 = pneg %p31
      $region34: #{puretran_forward.4} parent=31 // pred_check_branch
        %180 = sbr.rel (%p178) target = $region36
      $region35: #{puretran_forward.4} parent=31 // pred_region
        %s181 = smul.u32 2, %s11
        %p182 = scmp.lt.s32.totalorder %s181, 3
        %s183 = scalar_select %p182, %s181, 3
        %s184 = smul.addr %s183, 8
        %s185 = scalar_lea.vmem %s0, %s184
        %s186 = smul.u32 2, %s11
      $region36: #{puretran_forward.4} parent=31 // pred_fallthru
        _
    $region32: #{puretran_forward.4} parent=5 // pred_fallthru
      _
    %p187 = scmp.le.s32.totalorder 1, %s11
    %p188 = scmp.lt.s32.totalorder %s11, 3
    %p189 = pnand %p187, %p188
    %p190 = pneg %p189
    // Predicated region
    $region37: #{puretran_forward.4} parent=5 // pred_check
      _
    $region38: #{puretran_forward.4} parent=5 // pred_check_branch
      %192 = sbr.rel (%p189) target = $region40
    $region39: #{puretran_forward.4} parent=5 // pred_region
      %s193 = ssub.s32 %s11, 1
      %s194 = smul.u32 2, %s16
      %p195 = scmp.lt.s32.totalorder %s194, 3
      %s196 = scalar_select %p195, %s194, 3
      %s197 = smul.addr %s196, 8
      %s198 = scalar_lea.vmem %s0, %s197
      %p199 = pneg %p37
      %p200 = pneg %p34
      %p201 = pneg %p58
      %p202 = pneg %p55
      %p203 = pneg %p79
      %p204 = pneg %p76
      %p205 = pneg %p100
      %p206 = pneg %p97
      %p207 = pneg %p121
      %p208 = pneg %p118
      %p209 = pneg %p147
      %p210 = pneg %p144
      %s211 = smul.u32 2, %s16
      %p212 = scmp.lt.s32.totalorder %s211, 3
      %s213 = scalar_select %p212, %s211, 3
      %s214 = smul.addr %s213, 4
      %s215 = scalar_lea.vmem %s5, %s214
      %s216 = smul.u32 2, %s16
      %p217 = scmp.lt.s32.totalorder %s216, 3
      %s218 = scalar_select %p217, %s216, 3
      %s219 = smul.addr %s218, 8
      %s220 = scalar_lea.vmem %s0, %s219
      %s221 = smul.u32 2, %s16
      %s222 = smul.u32 2, %s16
      %p223 = scmp.lt.s32.totalorder %s222, 3
      %s224 = scalar_select %p223, %s222, 3
      %s225 = smul.addr %s224, 4
      %s226 = scalar_lea.vmem %s5, %s225
      %s227 = smul.u32 2, %s16
      %v229 = vld [vmem:[%s220] sm:$0xff]
      %v230 = vld [vmem:[%s220 + $0x8] sm:$0xff]
      %v231 = vpack.c.bf16 %v230, %v229
      %v232 = vld [vmem:[%s1] sm:$0xf]
      %v233 = vld [vmem:[%s2] sm:$0x1]
      %v235 = vlaneseq
      %v236 = vshrl.u32 %v235, 7
      %v237 = vsub.s32 0, %v236
      %v238 = vrot.slane %v233, %v237
      %vm240 = vcmask 64512
      %v242 = vsel %vm240, %v231, 0
      %v245 = vsel %vm240, %v232, 0
      %247 = vmatprep.subr.bf16.mxu0 0
      %248 = vmatpush1.bf16.xpose.msra.mxu0 0
      %249 = vmatprep.subr.bf16.mxu0 0
      %250 = vmatpush1.bf16.xpose.msra.mxu0 0
      %251 = vmatprep.subr.bf16.mxu0 0
      %252 = vmatpush1.bf16.xpose.msra.mxu0 0
      %253 = vmatprep.subr.bf16.mxu0 0
      %254 = vmatpush1.bf16.xpose.msra.mxu0 0
      %255 = vmatprep.subr.bf16.mxu0 0
      %256 = vmatpush1.bf16.xpose.msra.mxu0 0
      %257 = vmatprep.subr.bf16.mxu0 0
      %258 = vmatpush1.bf16.xpose.msra.mxu0 0
      %259 = vmatprep.subr.bf16.mxu0 0
      %260 = vmatpush1.bf16.xpose.msra.mxu0 0
      %261 = vmatprep.subr.bf16.mxu0 0
      %262 = vmatpush1.bf16.xpose.msra.mxu0 %v245
      %263 = vmatprep.subr.bf16.mxu0 0
      %264 = vmatpush2.bf16.xpose.msra.mxu0 0
      %265 = vmatprep.subr.bf16.mxu0 0
      %266 = vmatpush2.bf16.xpose.msra.mxu0 0
      %267 = vmatprep.subr.bf16.mxu0 0
      %268 = vmatpush2.bf16.xpose.msra.mxu0 0
      %269 = vmatprep.subr.bf16.mxu0 0
      %270 = vmatpush2.bf16.xpose.msra.mxu0 0
      %271 = vmatprep.subr.bf16.mxu0 0
      %272 = vmatpush2.bf16.xpose.msra.mxu0 0
      %273 = vmatprep.subr.bf16.mxu0 0
      %274 = vmatpush2.bf16.xpose.msra.mxu0 0
      %275 = vmatprep.subr.bf16.mxu0 0
      %276 = vmatpush2.bf16.xpose.msra.mxu0 0
      %277 = vmatprep.subr.bf16.mxu0 0
      %278 = vmatpush2.bf16.xpose.msra.mxu0 0
      %279 = vmatprep.mubr.bf16.mxu0 0
      %280 = vmatmul.mubr.bf16.gmra.mxu0 %v242
      %v281 = vpop.f32.mrf.mxu0
      %v282 = vadd.f32 %v238, %v281
      %v283 = vpop.f32.mrf.mxu0
      %v284 = vpop.f32.mrf.mxu0
      %v285 = vadd.f32 %v238, %v284
      %v286 = vpop.f32.mrf.mxu0
      %287 = vdwg.mxu0
      %v288 = vpack.c.bf16 %v285, %v282
      %v289 = vld [vmem:[%s3] sm:$0xf]
      %v290 = vld [vmem:[%s3 + $0x4] sm:$0xf]
      %v291 = vld [vmem:[%s3 + $0x8] sm:$0xf]
      %v292 = vld [vmem:[%s3 + $0xc] sm:$0xf]
      %v293 = vld [vmem:[%s4] sm:$0x1]
      %v295 = vlaneseq
      %v296 = vshrl.u32 %v295, 7
      %v297 = vsub.s32 0, %v296
      %v298 = vrot.slane %v293, %v297
      %v304 = vunpack.c.l.b16 %v289
      %v305 = vunpack.c.l.b16 %v290
      %v306 = vunpack.c.l.b16 %v291
      %v307 = vunpack.c.l.b16 %v292
      %v308 = vpack.c.b16 %v305, %v304
      %v309 = vpack.c.b16 %v307, %v306
      %v311 = vsel %vm240, %v288, 0
      %v314 = vsel %vm240, %v308, 0
      %v317 = vsel %vm240, %v309, 0
      %319 = vmatprep.subr.bf16.mxu0 0
      %320 = vmatpush1.bf16.xpose.msra.mxu0 0
      %321 = vmatprep.subr.bf16.mxu0 0
      %322 = vmatpush1.bf16.xpose.msra.mxu0 0
      %323 = vmatprep.subr.bf16.mxu0 0
      %324 = vmatpush1.bf16.xpose.msra.mxu0 0
      %325 = vmatprep.subr.bf16.mxu0 0
      %326 = vmatpush1.bf16.xpose.msra.mxu0 0
      %327 = vmatprep.subr.bf16.mxu0 0
      %328 = vmatpush1.bf16.xpose.msra.mxu0 0
      %329 = vmatprep.subr.bf16.mxu0 0
      %330 = vmatpush1.bf16.xpose.msra.mxu0 0
      %331 = vmatprep.subr.bf16.mxu0 0
      %332 = vmatpush1.bf16.xpose.msra.mxu0 %v317
      %333 = vmatprep.subr.bf16.mxu0 0
      %334 = vmatpush1.bf16.xpose.msra.mxu0 %v314
      %335 = vmatprep.subr.bf16.mxu0 0
      %336 = vmatpush2.bf16.xpose.msra.mxu0 0
      %337 = vmatprep.subr.bf16.mxu0 0
      %338 = vmatpush2.bf16.xpose.msra.mxu0 0
      %339 = vmatprep.subr.bf16.mxu0 0
      %340 = vmatpush2.bf16.xpose.msra.mxu0 0
      %341 = vmatprep.subr.bf16.mxu0 0
      %342 = vmatpush2.bf16.xpose.msra.mxu0 0
      %343 = vmatprep.subr.bf16.mxu0 0
      %344 = vmatpush2.bf16.xpose.msra.mxu0 0
      %345 = vmatprep.subr.bf16.mxu0 0
      %346 = vmatpush2.bf16.xpose.msra.mxu0 0
      %347 = vmatprep.subr.bf16.mxu0 0
      %348 = vmatpush2.bf16.xpose.msra.mxu0 0
      %349 = vmatprep.subr.bf16.mxu0 0
      %350 = vmatpush2.bf16.xpose.msra.mxu0 0
      %351 = vmatprep.mubr.bf16.mxu0 0
      %352 = vmatmul.mubr.bf16.gmra.mxu0 %v311
      %v353 = vpop.f32.mrf.mxu0
      %v354 = vadd.f32 %v298, %v353
      %v355 = vpop.f32.mrf.mxu0
      %v356 = vpop.f32.mrf.mxu0
      %v357 = vadd.f32 %v298, %v356
      %v358 = vpop.f32.mrf.mxu0
      %359 = vdwg.mxu0
      %v360 = vpack.c.bf16 %v357, %v354
      %v362 = vunpack.c.l.b16 %v360
      %v363 = vunpack.c.h.b16 %v360
      %v364 = vpack.c.b16 %v362, %v362
      %v365 = vpack.c.b16 %v363, %v363
      %vm368 = vcmask 257024
      %369 = vst.msk [vmem:[%s226] sm:$0xf] %vm368, %v364
      %370 = vst.msk [vmem:[%s226 + $0x4] sm:$0xf] %vm368, %v365
      %s371 = smul.u32 2, %s16
      %p372 = scmp.lt.s32.totalorder %s371, 3
      %s373 = scalar_select %p372, %s371, 3
      %s374 = smul.addr %s373, 4
      %s375 = scalar_lea.vmem %s5, %s374
      // Predicated region
      $region41: #{puretran_forward.4} parent=39 // pred_check
        %p376 = pneg %p144
      $region42: #{puretran_forward.4} parent=39 // pred_check_branch
        %378 = sbr.rel (%p376) target = $region44
      $region43: #{puretran_forward.4} parent=39 // pred_region
        %s379 = smul.u32 2, %s16
      $region44: #{puretran_forward.4} parent=39 // pred_fallthru
        _
    $region40: #{puretran_forward.4} parent=5 // pred_fallthru
      _
    %p380 = scmp.le.s32.totalorder 2, %s11
    // Predicated region
    $region45: #{puretran_forward.4} parent=5 // pred_check
      %p381 = pneg %p380
    $region46: #{puretran_forward.4} parent=5 // pred_check_branch
      %383 = sbr.rel (%p381) target = $region48
    $region47: #{puretran_forward.4} parent=5 // pred_region
      %s384 = ssub.s32 %s11, 2
      // Predicated region
      $region49: #{puretran_forward.4} parent=47 // pred_check
        %p385 = pneg %p150
      $region50: #{puretran_forward.4} parent=47 // pred_check_branch
        %387 = sbr.rel (%p385) target = $region52
      $region51: #{puretran_forward.4} parent=47 // pred_region
        %s388 = smul.u32 2, %s17
        %p389 = scmp.lt.s32.totalorder %s388, 3
        %s390 = scalar_select %p389, %s388, 3
        %s391 = smul.addr %s390, 4
        %s392 = scalar_lea.vmem %s5, %s391
      $region52: #{puretran_forward.4} parent=47 // pred_fallthru
        _
    $region48: #{puretran_forward.4} parent=5 // pred_fallthru
      _
  $region6: #{puretran_forward.4} parent=0 // loop_footer
    %s15 = sadd.s32 1, %s11
  $region7: #{puretran_forward.4} parent=0 // loop_footer_branch
    %10 = sbr.rel target = $region3
  $region8: #{puretran_forward.4} parent=0 // loop_exit
    _

// kernel: puretran_forward.7
$region0: #{puretran_forward.7}
  #allocation0 [shape = 'u32[]', space=smem, size = 0x4, offset = 0x4, fixed_abs, tag = 'smem constant byte address 0x4 - core index']
  #allocation1 [shape = 'u32[144,128]{1,0:T(1,128)}', space=vmem, size = 0x12000, scoped, tag = 'internal scratch']
  %s0 = inlined_call_operand.vmem [shape: bf16[16,32], index: 0, kind: input, shape index: {}]
  %s1 = inlined_call_operand.vmem [shape: bf16[8,32], index: 1, kind: input, shape index: {}]
  %s2 = inlined_call_operand.vmem [shape: f32[1,8], index: 2, kind: input, shape index: {}]
  %s3 = inlined_call_operand.vmem [shape: bf16[10,8], index: 3, kind: input, shape index: {}]
  %s4 = inlined_call_operand.vmem [shape: f32[1,10], index: 4, kind: input, shape index: {}]
  %s5 = inlined_call_operand.vmem [shape: f32[16,10], index: 5, kind: output, shape index: {}]
  %s6 = sld [smem:[#allocation0]]
  $region53: #{puretran_forward.7} parent=0
    _
  %s8 = ssub.s32 1, %s6
  %s9 = scalar_select 0, %s8, %s6
  loop: start=0, step=1, limit=4
  $region2: #{puretran_forward.7} parent=0 // loop_pre_header
    _
  $region3: #{puretran_forward.7} parent=0 // loop_header
    %s11 = sphi 0, %s15
    %p12 = scmp.ge.s32.totalorder %s11, 4
    %s21 = sphi 0, %s23
    %s24 = sphi 0, %s21
    %s25 = sphi 0, %s24
    %s41 = sphi 0, %s25
    %s45 = sphi 0, %s45
    %s47 = sphi 0, %s45
    %s48 = sphi 0, %s47
    %s62 = sphi 0, %s48
    %s66 = sphi 0, %s66
    %s68 = sphi 0, %s66
    %s69 = sphi 0, %s68
    %s83 = sphi 0, %s69
    %s87 = sphi 0, %s87
    %s89 = sphi 0, %s87
    %s90 = sphi 0, %s89
    %s104 = sphi 0, %s90
    %s108 = sphi 0, %s108
    %s110 = sphi 0, %s108
    %s111 = sphi 0, %s110
    %s125 = sphi 0, %s111
    %s131 = sphi 0, %s133
    %s134 = sphi 0, %s131
    %s135 = sphi 0, %s134
    %s151 = sphi 0, %s135
  $region4: #{puretran_forward.7} parent=0 // loop_header_branch
    %14 = sbr.rel (%p12) target = $region8
  $region5: #{puretran_forward.7} parent=0 // loop_body
    %s16 = ssub.s32 %s11, 1
    %s17 = ssub.s32 %s11, 2
    %s18 = sadd.s32 %s11, 1
    %s19 = ssub.s32 %s11, %s18
    %p20 = scmp.eq.s32.totalorder %s19, 0
    %s22 = sadd.s32 %s21, 1
    %s23 = scalar_select %p20, %s21, %s22
    %p26 = pneg %p20
    %p27 = scmp.eq.s32.totalorder %s11, 1
    %p28 = por %p26, %p27
    %p29 = scmp.ne.s32.totalorder %s21, %s24
    %p30 = scmp.eq.s32.totalorder %s11, 0
    %p31 = por %p29, %p30
    %p32 = scmp.ne.s32.totalorder %s21, %s24
    %p33 = scmp.eq.s32.totalorder %s16, 1
    %p34 = por %p32, %p33
    %p35 = scmp.ne.s32.totalorder %s24, %s25
    %p36 = scmp.eq.s32.totalorder %s16, 0
    %p37 = por %p35, %p36
    %p38 = scmp.ne.s32.totalorder %s24, %s25
    %p39 = scmp.eq.s32.totalorder %s17, 1
    %p40 = por %p38, %p39
    %p42 = scmp.ne.s32.totalorder %s25, %s41
    %p43 = scmp.eq.s32.totalorder %s17, 0
    %p44 = por %p42, %p43
    %s46 = sadd.s32 %s45, 1
    %p49 = scmp.eq.s32.totalorder %s11, 1
    %p50 = scmp.ne.s32.totalorder %s45, %s47
    %p51 = scmp.eq.s32.totalorder %s11, 0
    %p52 = por %p50, %p51
    %p53 = scmp.ne.s32.totalorder %s45, %s47
    %p54 = scmp.eq.s32.totalorder %s16, 1
    %p55 = por %p53, %p54
    %p56 = scmp.ne.s32.totalorder %s47, %s48
    %p57 = scmp.eq.s32.totalorder %s16, 0
    %p58 = por %p56, %p57
    %p59 = scmp.ne.s32.totalorder %s47, %s48
    %p60 = scmp.eq.s32.totalorder %s17, 1
    %p61 = por %p59, %p60
    %p63 = scmp.ne.s32.totalorder %s48, %s62
    %p64 = scmp.eq.s32.totalorder %s17, 0
    %p65 = por %p63, %p64
    %s67 = sadd.s32 %s66, 1
    %p70 = scmp.eq.s32.totalorder %s11, 1
    %p71 = scmp.ne.s32.totalorder %s66, %s68
    %p72 = scmp.eq.s32.totalorder %s11, 0
    %p73 = por %p71, %p72
    %p74 = scmp.ne.s32.totalorder %s66, %s68
    %p75 = scmp.eq.s32.totalorder %s16, 1
    %p76 = por %p74, %p75
    %p77 = scmp.ne.s32.totalorder %s68, %s69
    %p78 = scmp.eq.s32.totalorder %s16, 0
    %p79 = por %p77, %p78
    %p80 = scmp.ne.s32.totalorder %s68, %s69
    %p81 = scmp.eq.s32.totalorder %s17, 1
    %p82 = por %p80, %p81
    %p84 = scmp.ne.s32.totalorder %s69, %s83
    %p85 = scmp.eq.s32.totalorder %s17, 0
    %p86 = por %p84, %p85
    %s88 = sadd.s32 %s87, 1
    %p91 = scmp.eq.s32.totalorder %s11, 1
    %p92 = scmp.ne.s32.totalorder %s87, %s89
    %p93 = scmp.eq.s32.totalorder %s11, 0
    %p94 = por %p92, %p93
    %p95 = scmp.ne.s32.totalorder %s87, %s89
    %p96 = scmp.eq.s32.totalorder %s16, 1
    %p97 = por %p95, %p96
    %p98 = scmp.ne.s32.totalorder %s89, %s90
    %p99 = scmp.eq.s32.totalorder %s16, 0
    %p100 = por %p98, %p99
    %p101 = scmp.ne.s32.totalorder %s89, %s90
    %p102 = scmp.eq.s32.totalorder %s17, 1
    %p103 = por %p101, %p102
    %p105 = scmp.ne.s32.totalorder %s90, %s104
    %p106 = scmp.eq.s32.totalorder %s17, 0
    %p107 = por %p105, %p106
    %s109 = sadd.s32 %s108, 1
    %p112 = scmp.eq.s32.totalorder %s11, 1
    %p113 = scmp.ne.s32.totalorder %s108, %s110
    %p114 = scmp.eq.s32.totalorder %s11, 0
    %p115 = por %p113, %p114
    %p116 = scmp.ne.s32.totalorder %s108, %s110
    %p117 = scmp.eq.s32.totalorder %s16, 1
    %p118 = por %p116, %p117
    %p119 = scmp.ne.s32.totalorder %s110, %s111
    %p120 = scmp.eq.s32.totalorder %s16, 0
    %p121 = por %p119, %p120
    %p122 = scmp.ne.s32.totalorder %s110, %s111
    %p123 = scmp.eq.s32.totalorder %s17, 1
    %p124 = por %p122, %p123
    %p126 = scmp.ne.s32.totalorder %s111, %s125
    %p127 = scmp.eq.s32.totalorder %s17, 0
    %p128 = por %p126, %p127
    %s129 = ssub.s32 %s11, %s18
    %p130 = scmp.eq.s32.totalorder %s129, 0
    %s132 = sadd.s32 %s131, 1
    %s133 = scalar_select %p130, %s131, %s132
    %p136 = pneg %p130
    %p137 = scmp.eq.s32.totalorder %s11, 1
    %p138 = por %p136, %p137
    %p139 = scmp.ne.s32.totalorder %s131, %s134
    %p140 = scmp.eq.s32.totalorder %s11, 0
    %p141 = por %p139, %p140
    %p142 = scmp.ne.s32.totalorder %s131, %s134
    %p143 = scmp.eq.s32.totalorder %s16, 1
    %p144 = por %p142, %p143
    %p145 = scmp.ne.s32.totalorder %s134, %s135
    %p146 = scmp.eq.s32.totalorder %s16, 0
    %p147 = por %p145, %p146
    %p148 = scmp.ne.s32.totalorder %s134, %s135
    %p149 = scmp.eq.s32.totalorder %s17, 1
    %p150 = por %p148, %p149
    %p152 = scmp.ne.s32.totalorder %s135, %s151
    %p153 = scmp.eq.s32.totalorder %s17, 0
    %p154 = por %p152, %p153
    %p155 = scmp.le.s32.totalorder 1, %s11
    %p156 = scmp.lt.s32.totalorder %s11, 3
    %p157 = pnand %p155, %p156
    %p158 = pneg %p157
    // Predicated region
    $region9: #{puretran_forward.7} parent=5 // pred_check
      _
    $region10: #{puretran_forward.7} parent=5 // pred_check_branch
      %160 = sbr.rel (%p157) target = $region12
    $region11: #{puretran_forward.7} parent=5 // pred_region
      %s161 = ssub.s32 %s11, 1
      // Predicated region
      $region13: #{puretran_forward.7} parent=11 // pred_check
        %p162 = pneg %p58
      $region14: #{puretran_forward.7} parent=11 // pred_check_branch
        %164 = sbr.rel (%p162) target = $region16
      $region15: #{puretran_forward.7} parent=11 // pred_region
        _
      $region16: #{puretran_forward.7} parent=11 // pred_fallthru
        _
      // Predicated region
      $region17: #{puretran_forward.7} parent=11 // pred_check
        %p165 = pneg %p79
      $region18: #{puretran_forward.7} parent=11 // pred_check_branch
        %167 = sbr.rel (%p165) target = $region20
      $region19: #{puretran_forward.7} parent=11 // pred_region
        _
      $region20: #{puretran_forward.7} parent=11 // pred_fallthru
        _
      // Predicated region
      $region21: #{puretran_forward.7} parent=11 // pred_check
        %p168 = pneg %p100
      $region22: #{puretran_forward.7} parent=11 // pred_check_branch
        %170 = sbr.rel (%p168) target = $region24
      $region23: #{puretran_forward.7} parent=11 // pred_region
        _
      $region24: #{puretran_forward.7} parent=11 // pred_fallthru
        _
      // Predicated region
      $region25: #{puretran_forward.7} parent=11 // pred_check
        %p171 = pneg %p121
      $region26: #{puretran_forward.7} parent=11 // pred_check_branch
        %173 = sbr.rel (%p171) target = $region28
      $region27: #{puretran_forward.7} parent=11 // pred_region
        _
      $region28: #{puretran_forward.7} parent=11 // pred_fallthru
        _
    $region12: #{puretran_forward.7} parent=5 // pred_fallthru
      _
    %p174 = scmp.lt.s32.totalorder %s11, 2
    // Predicated region
    $region29: #{puretran_forward.7} parent=5 // pred_check
      %p175 = pneg %p174
    $region30: #{puretran_forward.7} parent=5 // pred_check_branch
      %177 = sbr.rel (%p175) target = $region32
    $region31: #{puretran_forward.7} parent=5 // pred_region
      // Predicated region
      $region33: #{puretran_forward.7} parent=31 // pred_check
        %p178 = pneg %p31
      $region34: #{puretran_forward.7} parent=31 // pred_check_branch
        %180 = sbr.rel (%p178) target = $region36
      $region35: #{puretran_forward.7} parent=31 // pred_region
        %p181 = scmp.lt.s32.totalorder %s11, 1
        %s182 = scalar_select %p181, %s11, 1
        %s183 = smul.addr %s182, 4
        %s184 = scalar_lea.vmem %s0, %s183
      $region36: #{puretran_forward.7} parent=31 // pred_fallthru
        _
    $region32: #{puretran_forward.7} parent=5 // pred_fallthru
      _
    %p185 = scmp.le.s32.totalorder 1, %s11
    %p186 = scmp.lt.s32.totalorder %s11, 3
    %p187 = pnand %p185, %p186
    %p188 = pneg %p187
    // Predicated region
    $region37: #{puretran_forward.7} parent=5 // pred_check
      _
    $region38: #{puretran_forward.7} parent=5 // pred_check_branch
      %190 = sbr.rel (%p187) target = $region40
    $region39: #{puretran_forward.7} parent=5 // pred_region
      %s191 = ssub.s32 %s11, 1
      %p192 = scmp.lt.s32.totalorder %s16, 1
      %s193 = scalar_select %p192, %s16, 1
      %s194 = smul.addr %s193, 4
      %s195 = scalar_lea.vmem %s0, %s194
      %p196 = pneg %p37
      %p197 = pneg %p34
      %p198 = pneg %p58
      %p199 = pneg %p55
      %p200 = pneg %p79
      %p201 = pneg %p76
      %p202 = pneg %p100
      %p203 = pneg %p97
      %p204 = pneg %p121
      %p205 = pneg %p118
      %p206 = pneg %p147
      %p207 = pneg %p144
      %p208 = scmp.lt.s32.totalorder %s16, 1
      %s209 = scalar_select %p208, %s16, 1
      %s210 = smul.addr %s209, 8
      %s211 = scalar_lea.vmem %s5, %s210
      %p212 = scmp.lt.s32.totalorder %s16, 1
      %s213 = scalar_select %p212, %s16, 1
      %s214 = smul.addr %s213, 4
      %s215 = scalar_lea.vmem %s0, %s214
      %p216 = scmp.lt.s32.totalorder %s16, 1
      %s217 = scalar_select %p216, %s16, 1
      %s218 = smul.addr %s217, 8
      %s219 = scalar_lea.vmem %s5, %s218
      %v221 = vld [vmem:[%s215] sm:$0xf]
      %v222 = vld [vmem:[%s1] sm:$0xf]
      %v223 = vld [vmem:[%s2] sm:$0x1]
      %v225 = vlaneseq
      %v226 = vshrl.u32 %v225, 7
      %v227 = vsub.s32 0, %v226
      %v228 = vrot.slane %v223, %v227
      %vm230 = vcmask 261120
      %v232 = vsel %vm230, %v221, 0
      %v235 = vsel %vm230, %v222, 0
      %237 = vmatprep.subr.bf16.mxu0 0
      %238 = vmatpush1.bf16.xpose.msra.mxu0 0
      %239 = vmatprep.subr.bf16.mxu0 0
      %240 = vmatpush1.bf16.xpose.msra.mxu0 0
      %241 = vmatprep.subr.bf16.mxu0 0
      %242 = vmatpush1.bf16.xpose.msra.mxu0 0
      %243 = vmatprep.subr.bf16.mxu0 0
      %244 = vmatpush1.bf16.xpose.msra.mxu0 0
      %245 = vmatprep.subr.bf16.mxu0 0
      %246 = vmatpush1.bf16.xpose.msra.mxu0 0
      %247 = vmatprep.subr.bf16.mxu0 0
      %248 = vmatpush1.bf16.xpose.msra.mxu0 0
      %249 = vmatprep.subr.bf16.mxu0 0
      %250 = vmatpush1.bf16.xpose.msra.mxu0 0
      %251 = vmatprep.subr.bf16.mxu0 0
      %252 = vmatpush1.bf16.xpose.msra.mxu0 %v235
      %253 = vmatprep.subr.bf16.mxu0 0
      %254 = vmatpush2.bf16.xpose.msra.mxu0 0
      %255 = vmatprep.subr.bf16.mxu0 0
      %256 = vmatpush2.bf16.xpose.msra.mxu0 0
      %257 = vmatprep.subr.bf16.mxu0 0
      %258 = vmatpush2.bf16.xpose.msra.mxu0 0
      %259 = vmatprep.subr.bf16.mxu0 0
      %260 = vmatpush2.bf16.xpose.msra.mxu0 0
      %261 = vmatprep.subr.bf16.mxu0 0
      %262 = vmatpush2.bf16.xpose.msra.mxu0 0
      %263 = vmatprep.subr.bf16.mxu0 0
      %264 = vmatpush2.bf16.xpose.msra.mxu0 0
      %265 = vmatprep.subr.bf16.mxu0 0
      %266 = vmatpush2.bf16.xpose.msra.mxu0 0
      %267 = vmatprep.subr.bf16.mxu0 0
      %268 = vmatpush2.bf16.xpose.msra.mxu0 0
      %269 = vmatprep.mubr.bf16.mxu0 0
      %270 = vmatmul.mubr.bf16.gmra.mxu0 %v232
      %v271 = vpop.f32.mrf.mxu0
      %v272 = vadd.f32 %v228, %v271
      %v273 = vpop.f32.mrf.mxu0
      %v274 = vpop.f32.mrf.mxu0
      %v275 = vpop.f32.mrf.mxu0
      %276 = vdwg.mxu0
      %v277 = vpack.c.bf16 %v272, %v272
      %v278 = vld [vmem:[%s3] sm:$0xf]
      %v279 = vld [vmem:[%s3 + $0x4] sm:$0x1]
      %v280 = vld [vmem:[%s4] sm:$0x1]
      %v282 = vlaneseq
      %v283 = vshrl.u32 %v282, 7
      %v284 = vsub.s32 0, %v283
      %v285 = vrot.slane %v280, %v284
      %v289 = vunpack.c.l.b16 %v278
      %v290 = vunpack.c.l.b16 %v279
      %v291 = vpack.c.b16 %v290, %v289
      %vm292 = vcmask 64512
      %v294 = vsel %vm292, %v277, 0
      %v297 = vsel %vm292, %v291, 0
      %299 = vmatprep.subr.bf16.mxu0 0
      %300 = vmatpush1.bf16.xpose.msra.mxu0 0
      %301 = vmatprep.subr.bf16.mxu0 0
      %302 = vmatpush1.bf16.xpose.msra.mxu0 0
      %303 = vmatprep.subr.bf16.mxu0 0
      %304 = vmatpush1.bf16.xpose.msra.mxu0 0
      %305 = vmatprep.subr.bf16.mxu0 0
      %306 = vmatpush1.bf16.xpose.msra.mxu0 0
      %307 = vmatprep.subr.bf16.mxu0 0
      %308 = vmatpush1.bf16.xpose.msra.mxu0 0
      %309 = vmatprep.subr.bf16.mxu0 0
      %310 = vmatpush1.bf16.xpose.msra.mxu0 0
      %311 = vmatprep.subr.bf16.mxu0 0
      %312 = vmatpush1.bf16.xpose.msra.mxu0 0
      %313 = vmatprep.subr.bf16.mxu0 0
      %314 = vmatpush1.bf16.xpose.msra.mxu0 %v297
      %315 = vmatprep.subr.bf16.mxu0 0
      %316 = vmatpush2.bf16.xpose.msra.mxu0 0
      %317 = vmatprep.subr.bf16.mxu0 0
      %318 = vmatpush2.bf16.xpose.msra.mxu0 0
      %319 = vmatprep.subr.bf16.mxu0 0
      %320 = vmatpush2.bf16.xpose.msra.mxu0 0
      %321 = vmatprep.subr.bf16.mxu0 0
      %322 = vmatpush2.bf16.xpose.msra.mxu0 0
      %323 = vmatprep.subr.bf16.mxu0 0
      %324 = vmatpush2.bf16.xpose.msra.mxu0 0
      %325 = vmatprep.subr.bf16.mxu0 0
      %326 = vmatpush2.bf16.xpose.msra.mxu0 0
      %327 = vmatprep.subr.bf16.mxu0 0
      %328 = vmatpush2.bf16.xpose.msra.mxu0 0
      %329 = vmatprep.subr.bf16.mxu0 0
      %330 = vmatpush2.bf16.xpose.msra.mxu0 0
      %331 = vmatprep.mubr.bf16.mxu0 0
      %332 = vmatmul.mubr.bf16.gmra.mxu0 %v294
      %v333 = vpop.f32.mrf.mxu0
      %v334 = vadd.f32 %v285, %v333
      %v335 = vpop.f32.mrf.mxu0
      %v336 = vpop.f32.mrf.mxu0
      %v337 = vpop.f32.mrf.mxu0
      %338 = vdwg.mxu0
      %vm339 = vcmask 80896
      %340 = vst.msk [vmem:[%s219] sm:$0xff] %vm339, %v334
      %p341 = scmp.lt.s32.totalorder %s16, 1
      %s342 = scalar_select %p341, %s16, 1
      %s343 = smul.addr %s342, 8
      %s344 = scalar_lea.vmem %s5, %s343
      // Predicated region
      $region41: #{puretran_forward.7} parent=39 // pred_check
        %p345 = pneg %p144
      $region42: #{puretran_forward.7} parent=39 // pred_check_branch
        %347 = sbr.rel (%p345) target = $region44
      $region43: #{puretran_forward.7} parent=39 // pred_region
        _
      $region44: #{puretran_forward.7} parent=39 // pred_fallthru
        _
    $region40: #{puretran_forward.7} parent=5 // pred_fallthru
      _
    %p348 = scmp.le.s32.totalorder 2, %s11
    // Predicated region
    $region45: #{puretran_forward.7} parent=5 // pred_check
      %p349 = pneg %p348
    $region46: #{puretran_forward.7} parent=5 // pred_check_branch
      %351 = sbr.rel (%p349) target = $region48
    $region47: #{puretran_forward.7} parent=5 // pred_region
      %s352 = ssub.s32 %s11, 2
      // Predicated region
      $region49: #{puretran_forward.7} parent=47 // pred_check
        %p353 = pneg %p150
      $region50: #{puretran_forward.7} parent=47 // pred_check_branch
        %355 = sbr.rel (%p353) target = $region52
      $region51: #{puretran_forward.7} parent=47 // pred_region
        %p356 = scmp.lt.s32.totalorder %s17, 1
        %s357 = scalar_select %p356, %s17, 1
        %s358 = smul.addr %s357, 8
        %s359 = scalar_lea.vmem %s5, %s358
      $region52: #{puretran_forward.7} parent=47 // pred_fallthru
        _
    $region48: #{puretran_forward.7} parent=5 // pred_fallthru
      _
  $region6: #{puretran_forward.7} parent=0 // loop_footer
    %s15 = sadd.s32 1, %s11
  $region7: #{puretran_forward.7} parent=0 // loop_footer_branch
    %10 = sbr.rel target = $region3
  $region8: #{puretran_forward.7} parent=0 // loop_exit
    _

// kernel: puretran_forward.5
$region0: #{puretran_forward.5}
  #allocation0 [shape = 'u32[]', space=smem, size = 0x4, offset = 0x4, fixed_abs, tag = 'smem constant byte address 0x4 - core index']
  #allocation1 [shape = 'u32[144,128]{1,0:T(1,128)}', space=vmem, size = 0x12000, scoped, tag = 'internal scratch']
  #allocation2 [shape = 'f32[8,32]{1,0:T(8,128)}', space=vmem, size = 0x1000, scoped, tag = 'scratch operand']
  %s0 = inlined_call_operand.vmem [shape: bf16[4,8,32], index: 0, kind: input, shape index: {}]
  %s1 = inlined_call_operand.vmem [shape: bf16[96,32], index: 1, kind: input, shape index: {}]
  %s2 = inlined_call_operand.vmem [shape: f32[1,96], index: 2, kind: input, shape index: {}]
  %s3 = inlined_call_operand.vmem [shape: bf16[32,32], index: 3, kind: input, shape index: {}]
  %s4 = inlined_call_operand.vmem [shape: f32[1,32], index: 4, kind: input, shape index: {}]
  %s5 = inlined_call_operand.vmem [shape: f32[1,32], index: 5, kind: input, shape index: {}]
  %s6 = inlined_call_operand.vmem [shape: f32[1,32], index: 6, kind: input, shape index: {}]
  %s7 = inlined_call_operand.vmem [shape: bf16[64,32], index: 7, kind: input, shape index: {}]
  %s8 = inlined_call_operand.vmem [shape: f32[1,64], index: 8, kind: input, shape index: {}]
  %s9 = inlined_call_operand.vmem [shape: bf16[32,64], index: 9, kind: input, shape index: {}]
  %s10 = inlined_call_operand.vmem [shape: f32[1,32], index: 10, kind: input, shape index: {}]
  %s11 = inlined_call_operand.vmem [shape: f32[1,32], index: 11, kind: input, shape index: {}]
  %s12 = inlined_call_operand.vmem [shape: f32[1,32], index: 12, kind: input, shape index: {}]
  %s13 = inlined_call_operand.vmem [shape: bf16[4,8,32], index: 13, kind: output, shape index: {}]
  %s14 = sld [smem:[#allocation0]]
  $region85: #{puretran_forward.5} parent=0
    _
  %s16 = ssub.s32 1, %s14
  %s17 = scalar_select 0, %s16, %s14
  loop: start=0, step=1, limit=6
  $region2: #{puretran_forward.5} parent=0 // loop_pre_header
    _
  $region3: #{puretran_forward.5} parent=0 // loop_header
    %s19 = sphi 0, %s23
    %p20 = scmp.ge.s32.totalorder %s19, 6
    %s29 = sphi 0, %s31
    %s32 = sphi 0, %s29
    %s33 = sphi 0, %s32
    %s49 = sphi 0, %s33
    %s53 = sphi 0, %s53
    %s55 = sphi 0, %s53
    %s56 = sphi 0, %s55
    %s70 = sphi 0, %s56
    %s74 = sphi 0, %s74
    %s76 = sphi 0, %s74
    %s77 = sphi 0, %s76
    %s91 = sphi 0, %s77
    %s95 = sphi 0, %s95
    %s97 = sphi 0, %s95
    %s98 = sphi 0, %s97
    %s112 = sphi 0, %s98
    %s116 = sphi 0, %s116
    %s118 = sphi 0, %s116
    %s119 = sphi 0, %s118
    %s133 = sphi 0, %s119
    %s137 = sphi 0, %s137
    %s139 = sphi 0, %s137
    %s140 = sphi 0, %s139
    %s154 = sphi 0, %s140
    %s158 = sphi 0, %s158
    %s160 = sphi 0, %s158
    %s161 = sphi 0, %s160
    %s175 = sphi 0, %s161
    %s179 = sphi 0, %s179
    %s181 = sphi 0, %s179
    %s182 = sphi 0, %s181
    %s196 = sphi 0, %s182
    %s200 = sphi 0, %s200
    %s202 = sphi 0, %s200
    %s203 = sphi 0, %s202
    %s217 = sphi 0, %s203
    %s221 = sphi 0, %s221
    %s223 = sphi 0, %s221
    %s224 = sphi 0, %s223
    %s238 = sphi 0, %s224
    %s242 = sphi 0, %s242
    %s244 = sphi 0, %s242
    %s245 = sphi 0, %s244
    %s259 = sphi 0, %s245
    %s263 = sphi 0, %s263
    %s265 = sphi 0, %s263
    %s266 = sphi 0, %s265
    %s280 = sphi 0, %s266
    %s284 = sphi 0, %s284
    %s286 = sphi 0, %s284
    %s287 = sphi 0, %s286
    %s301 = sphi 0, %s287
    %s307 = sphi 0, %s309
    %s310 = sphi 0, %s307
    %s311 = sphi 0, %s310
    %s327 = sphi 0, %s311
  $region4: #{puretran_forward.5} parent=0 // loop_header_branch
    %22 = sbr.rel (%p20) target = $region8
  $region5: #{puretran_forward.5} parent=0 // loop_body
    %s24 = ssub.s32 %s19, 1
    %s25 = ssub.s32 %s19, 2
    %s26 = sadd.s32 %s19, 1
    %s27 = ssub.s32 %s19, %s26
    %p28 = scmp.eq.s32.totalorder %s27, 0
    %s30 = sadd.s32 %s29, 1
    %s31 = scalar_select %p28, %s29, %s30
    %p34 = pneg %p28
    %p35 = scmp.eq.s32.totalorder %s19, 3
    %p36 = por %p34, %p35
    %p37 = scmp.ne.s32.totalorder %s29, %s32
    %p38 = scmp.eq.s32.totalorder %s19, 0
    %p39 = por %p37, %p38
    %p40 = scmp.ne.s32.totalorder %s29, %s32
    %p41 = scmp.eq.s32.totalorder %s24, 3
    %p42 = por %p40, %p41
    %p43 = scmp.ne.s32.totalorder %s32, %s33
    %p44 = scmp.eq.s32.totalorder %s24, 0
    %p45 = por %p43, %p44
    %p46 = scmp.ne.s32.totalorder %s32, %s33
    %p47 = scmp.eq.s32.totalorder %s25, 3
    %p48 = por %p46, %p47
    %p50 = scmp.ne.s32.totalorder %s33, %s49
    %p51 = scmp.eq.s32.totalorder %s25, 0
    %p52 = por %p50, %p51
    %s54 = sadd.s32 %s53, 1
    %p57 = scmp.eq.s32.totalorder %s19, 3
    %p58 = scmp.ne.s32.totalorder %s53, %s55
    %p59 = scmp.eq.s32.totalorder %s19, 0
    %p60 = por %p58, %p59
    %p61 = scmp.ne.s32.totalorder %s53, %s55
    %p62 = scmp.eq.s32.totalorder %s24, 3
    %p63 = por %p61, %p62
    %p64 = scmp.ne.s32.totalorder %s55, %s56
    %p65 = scmp.eq.s32.totalorder %s24, 0
    %p66 = por %p64, %p65
    %p67 = scmp.ne.s32.totalorder %s55, %s56
    %p68 = scmp.eq.s32.totalorder %s25, 3
    %p69 = por %p67, %p68
    %p71 = scmp.ne.s32.totalorder %s56, %s70
    %p72 = scmp.eq.s32.totalorder %s25, 0
    %p73 = por %p71, %p72
    %s75 = sadd.s32 %s74, 1
    %p78 = scmp.eq.s32.totalorder %s19, 3
    %p79 = scmp.ne.s32.totalorder %s74, %s76
    %p80 = scmp.eq.s32.totalorder %s19, 0
    %p81 = por %p79, %p80
    %p82 = scmp.ne.s32.totalorder %s74, %s76
    %p83 = scmp.eq.s32.totalorder %s24, 3
    %p84 = por %p82, %p83
    %p85 = scmp.ne.s32.totalorder %s76, %s77
    %p86 = scmp.eq.s32.totalorder %s24, 0
    %p87 = por %p85, %p86
    %p88 = scmp.ne.s32.totalorder %s76, %s77
    %p89 = scmp.eq.s32.totalorder %s25, 3
    %p90 = por %p88, %p89
    %p92 = scmp.ne.s32.totalorder %s77, %s91
    %p93 = scmp.eq.s32.totalorder %s25, 0
    %p94 = por %p92, %p93
    %s96 = sadd.s32 %s95, 1
    %p99 = scmp.eq.s32.totalorder %s19, 3
    %p100 = scmp.ne.s32.totalorder %s95, %s97
    %p101 = scmp.eq.s32.totalorder %s19, 0
    %p102 = por %p100, %p101
    %p103 = scmp.ne.s32.totalorder %s95, %s97
    %p104 = scmp.eq.s32.totalorder %s24, 3
    %p105 = por %p103, %p104
    %p106 = scmp.ne.s32.totalorder %s97, %s98
    %p107 = scmp.eq.s32.totalorder %s24, 0
    %p108 = por %p106, %p107
    %p109 = scmp.ne.s32.totalorder %s97, %s98
    %p110 = scmp.eq.s32.totalorder %s25, 3
    %p111 = por %p109, %p110
    %p113 = scmp.ne.s32.totalorder %s98, %s112
    %p114 = scmp.eq.s32.totalorder %s25, 0
    %p115 = por %p113, %p114
    %s117 = sadd.s32 %s116, 1
    %p120 = scmp.eq.s32.totalorder %s19, 3
    %p121 = scmp.ne.s32.totalorder %s116, %s118
    %p122 = scmp.eq.s32.totalorder %s19, 0
    %p123 = por %p121, %p122
    %p124 = scmp.ne.s32.totalorder %s116, %s118
    %p125 = scmp.eq.s32.totalorder %s24, 3
    %p126 = por %p124, %p125
    %p127 = scmp.ne.s32.totalorder %s118, %s119
    %p128 = scmp.eq.s32.totalorder %s24, 0
    %p129 = por %p127, %p128
    %p130 = scmp.ne.s32.totalorder %s118, %s119
    %p131 = scmp.eq.s32.totalorder %s25, 3
    %p132 = por %p130, %p131
    %p134 = scmp.ne.s32.totalorder %s119, %s133
    %p135 = scmp.eq.s32.totalorder %s25, 0
    %p136 = por %p134, %p135
    %s138 = sadd.s32 %s137, 1
    %p141 = scmp.eq.s32.totalorder %s19, 3
    %p142 = scmp.ne.s32.totalorder %s137, %s139
    %p143 = scmp.eq.s32.totalorder %s19, 0
    %p144 = por %p142, %p143
    %p145 = scmp.ne.s32.totalorder %s137, %s139
    %p146 = scmp.eq.s32.totalorder %s24, 3
    %p147 = por %p145, %p146
    %p148 = scmp.ne.s32.totalorder %s139, %s140
    %p149 = scmp.eq.s32.totalorder %s24, 0
    %p150 = por %p148, %p149
    %p151 = scmp.ne.s32.totalorder %s139, %s140
    %p152 = scmp.eq.s32.totalorder %s25, 3
    %p153 = por %p151, %p152
    %p155 = scmp.ne.s32.totalorder %s140, %s154
    %p156 = scmp.eq.s32.totalorder %s25, 0
    %p157 = por %p155, %p156
    %s159 = sadd.s32 %s158, 1
    %p162 = scmp.eq.s32.totalorder %s19, 3
    %p163 = scmp.ne.s32.totalorder %s158, %s160
    %p164 = scmp.eq.s32.totalorder %s19, 0
    %p165 = por %p163, %p164
    %p166 = scmp.ne.s32.totalorder %s158, %s160
    %p167 = scmp.eq.s32.totalorder %s24, 3
    %p168 = por %p166, %p167
    %p169 = scmp.ne.s32.totalorder %s160, %s161
    %p170 = scmp.eq.s32.totalorder %s24, 0
    %p171 = por %p169, %p170
    %p172 = scmp.ne.s32.totalorder %s160, %s161
    %p173 = scmp.eq.s32.totalorder %s25, 3
    %p174 = por %p172, %p173
    %p176 = scmp.ne.s32.totalorder %s161, %s175
    %p177 = scmp.eq.s32.totalorder %s25, 0
    %p178 = por %p176, %p177
    %s180 = sadd.s32 %s179, 1
    %p183 = scmp.eq.s32.totalorder %s19, 3
    %p184 = scmp.ne.s32.totalorder %s179, %s181
    %p185 = scmp.eq.s32.totalorder %s19, 0
    %p186 = por %p184, %p185
    %p187 = scmp.ne.s32.totalorder %s179, %s181
    %p188 = scmp.eq.s32.totalorder %s24, 3
    %p189 = por %p187, %p188
    %p190 = scmp.ne.s32.totalorder %s181, %s182
    %p191 = scmp.eq.s32.totalorder %s24, 0
    %p192 = por %p190, %p191
    %p193 = scmp.ne.s32.totalorder %s181, %s182
    %p194 = scmp.eq.s32.totalorder %s25, 3
    %p195 = por %p193, %p194
    %p197 = scmp.ne.s32.totalorder %s182, %s196
    %p198 = scmp.eq.s32.totalorder %s25, 0
    %p199 = por %p197, %p198
    %s201 = sadd.s32 %s200, 1
    %p204 = scmp.eq.s32.totalorder %s19, 3
    %p205 = scmp.ne.s32.totalorder %s200, %s202
    %p206 = scmp.eq.s32.totalorder %s19, 0
    %p207 = por %p205, %p206
    %p208 = scmp.ne.s32.totalorder %s200, %s202
    %p209 = scmp.eq.s32.totalorder %s24, 3
    %p210 = por %p208, %p209
    %p211 = scmp.ne.s32.totalorder %s202, %s203
    %p212 = scmp.eq.s32.totalorder %s24, 0
    %p213 = por %p211, %p212
    %p214 = scmp.ne.s32.totalorder %s202, %s203
    %p215 = scmp.eq.s32.totalorder %s25, 3
    %p216 = por %p214, %p215
    %p218 = scmp.ne.s32.totalorder %s203, %s217
    %p219 = scmp.eq.s32.totalorder %s25, 0
    %p220 = por %p218, %p219
    %s222 = sadd.s32 %s221, 1
    %p225 = scmp.eq.s32.totalorder %s19, 3
    %p226 = scmp.ne.s32.totalorder %s221, %s223
    %p227 = scmp.eq.s32.totalorder %s19, 0
    %p228 = por %p226, %p227
    %p229 = scmp.ne.s32.totalorder %s221, %s223
    %p230 = scmp.eq.s32.totalorder %s24, 3
    %p231 = por %p229, %p230
    %p232 = scmp.ne.s32.totalorder %s223, %s224
    %p233 = scmp.eq.s32.totalorder %s24, 0
    %p234 = por %p232, %p233
    %p235 = scmp.ne.s32.totalorder %s223, %s224
    %p236 = scmp.eq.s32.totalorder %s25, 3
    %p237 = por %p235, %p236
    %p239 = scmp.ne.s32.totalorder %s224, %s238
    %p240 = scmp.eq.s32.totalorder %s25, 0
    %p241 = por %p239, %p240
    %s243 = sadd.s32 %s242, 1
    %p246 = scmp.eq.s32.totalorder %s19, 3
    %p247 = scmp.ne.s32.totalorder %s242, %s244
    %p248 = scmp.eq.s32.totalorder %s19, 0
    %p249 = por %p247, %p248
    %p250 = scmp.ne.s32.totalorder %s242, %s244
    %p251 = scmp.eq.s32.totalorder %s24, 3
    %p252 = por %p250, %p251
    %p253 = scmp.ne.s32.totalorder %s244, %s245
    %p254 = scmp.eq.s32.totalorder %s24, 0
    %p255 = por %p253, %p254
    %p256 = scmp.ne.s32.totalorder %s244, %s245
    %p257 = scmp.eq.s32.totalorder %s25, 3
    %p258 = por %p256, %p257
    %p260 = scmp.ne.s32.totalorder %s245, %s259
    %p261 = scmp.eq.s32.totalorder %s25, 0
    %p262 = por %p260, %p261
    %s264 = sadd.s32 %s263, 1
    %p267 = scmp.eq.s32.totalorder %s19, 3
    %p268 = scmp.ne.s32.totalorder %s263, %s265
    %p269 = scmp.eq.s32.totalorder %s19, 0
    %p270 = por %p268, %p269
    %p271 = scmp.ne.s32.totalorder %s263, %s265
    %p272 = scmp.eq.s32.totalorder %s24, 3
    %p273 = por %p271, %p272
    %p274 = scmp.ne.s32.totalorder %s265, %s266
    %p275 = scmp.eq.s32.totalorder %s24, 0
    %p276 = por %p274, %p275
    %p277 = scmp.ne.s32.totalorder %s265, %s266
    %p278 = scmp.eq.s32.totalorder %s25, 3
    %p279 = por %p277, %p278
    %p281 = scmp.ne.s32.totalorder %s266, %s280
    %p282 = scmp.eq.s32.totalorder %s25, 0
    %p283 = por %p281, %p282
    %s285 = sadd.s32 %s284, 1
    %p288 = scmp.eq.s32.totalorder %s19, 3
    %p289 = scmp.ne.s32.totalorder %s284, %s286
    %p290 = scmp.eq.s32.totalorder %s19, 0
    %p291 = por %p289, %p290
    %p292 = scmp.ne.s32.totalorder %s284, %s286
    %p293 = scmp.eq.s32.totalorder %s24, 3
    %p294 = por %p292, %p293
    %p295 = scmp.ne.s32.totalorder %s286, %s287
    %p296 = scmp.eq.s32.totalorder %s24, 0
    %p297 = por %p295, %p296
    %p298 = scmp.ne.s32.totalorder %s286, %s287
    %p299 = scmp.eq.s32.totalorder %s25, 3
    %p300 = por %p298, %p299
    %p302 = scmp.ne.s32.totalorder %s287, %s301
    %p303 = scmp.eq.s32.totalorder %s25, 0
    %p304 = por %p302, %p303
    %s305 = ssub.s32 %s19, %s26
    %p306 = scmp.eq.s32.totalorder %s305, 0
    %s308 = sadd.s32 %s307, 1
    %s309 = scalar_select %p306, %s307, %s308
    %p312 = pneg %p306
    %p313 = scmp.eq.s32.totalorder %s19, 3
    %p314 = por %p312, %p313
    %p315 = scmp.ne.s32.totalorder %s307, %s310
    %p316 = scmp.eq.s32.totalorder %s19, 0
    %p317 = por %p315, %p316
    %p318 = scmp.ne.s32.totalorder %s307, %s310
    %p319 = scmp.eq.s32.totalorder %s24, 3
    %p320 = por %p318, %p319
    %p321 = scmp.ne.s32.totalorder %s310, %s311
    %p322 = scmp.eq.s32.totalorder %s24, 0
    %p323 = por %p321, %p322
    %p324 = scmp.ne.s32.totalorder %s310, %s311
    %p325 = scmp.eq.s32.totalorder %s25, 3
    %p326 = por %p324, %p325
    %p328 = scmp.ne.s32.totalorder %s311, %s327
    %p329 = scmp.eq.s32.totalorder %s25, 0
    %p330 = por %p328, %p329
    %p331 = scmp.le.s32.totalorder 1, %s19
    %p332 = scmp.lt.s32.totalorder %s19, 5
    %p333 = pnand %p331, %p332
    %p334 = pneg %p333
    // Predicated region
    $region9: #{puretran_forward.5} parent=5 // pred_check
      _
    $region10: #{puretran_forward.5} parent=5 // pred_check_branch
      %336 = sbr.rel (%p333) target = $region12
    $region11: #{puretran_forward.5} parent=5 // pred_region
      %s337 = ssub.s32 %s19, 1
      // Predicated region
      $region13: #{puretran_forward.5} parent=11 // pred_check
        %p338 = pneg %p66
      $region14: #{puretran_forward.5} parent=11 // pred_check_branch
        %340 = sbr.rel (%p338) target = $region16
      $region15: #{puretran_forward.5} parent=11 // pred_region
        _
      $region16: #{puretran_forward.5} parent=11 // pred_fallthru
        _
      // Predicated region
      $region17: #{puretran_forward.5} parent=11 // pred_check
        %p341 = pneg %p87
      $region18: #{puretran_forward.5} parent=11 // pred_check_branch
        %343 = sbr.rel (%p341) target = $region20
      $region19: #{puretran_forward.5} parent=11 // pred_region
        _
      $region20: #{puretran_forward.5} parent=11 // pred_fallthru
        _
      // Predicated region
      $region21: #{puretran_forward.5} parent=11 // pred_check
        %p344 = pneg %p108
      $region22: #{puretran_forward.5} parent=11 // pred_check_branch
        %346 = sbr.rel (%p344) target = $region24
      $region23: #{puretran_forward.5} parent=11 // pred_region
        _
      $region24: #{puretran_forward.5} parent=11 // pred_fallthru
        _
      // Predicated region
      $region25: #{puretran_forward.5} parent=11 // pred_check
        %p347 = pneg %p129
      $region26: #{puretran_forward.5} parent=11 // pred_check_branch
        %349 = sbr.rel (%p347) target = $region28
      $region27: #{puretran_forward.5} parent=11 // pred_region
        _
      $region28: #{puretran_forward.5} parent=11 // pred_fallthru
        _
      // Predicated region
      $region29: #{puretran_forward.5} parent=11 // pred_check
        %p350 = pneg %p150
      $region30: #{puretran_forward.5} parent=11 // pred_check_branch
        %352 = sbr.rel (%p350) target = $region32
      $region31: #{puretran_forward.5} parent=11 // pred_region
        _
      $region32: #{puretran_forward.5} parent=11 // pred_fallthru
        _
      // Predicated region
      $region33: #{puretran_forward.5} parent=11 // pred_check
        %p353 = pneg %p171
      $region34: #{puretran_forward.5} parent=11 // pred_check_branch
        %355 = sbr.rel (%p353) target = $region36
      $region35: #{puretran_forward.5} parent=11 // pred_region
        _
      $region36: #{puretran_forward.5} parent=11 // pred_fallthru
        _
      // Predicated region
      $region37: #{puretran_forward.5} parent=11 // pred_check
        %p356 = pneg %p192
      $region38: #{puretran_forward.5} parent=11 // pred_check_branch
        %358 = sbr.rel (%p356) target = $region40
      $region39: #{puretran_forward.5} parent=11 // pred_region
        _
      $region40: #{puretran_forward.5} parent=11 // pred_fallthru
        _
      // Predicated region
      $region41: #{puretran_forward.5} parent=11 // pred_check
        %p359 = pneg %p213
      $region42: #{puretran_forward.5} parent=11 // pred_check_branch
        %361 = sbr.rel (%p359) target = $region44
      $region43: #{puretran_forward.5} parent=11 // pred_region
        _
      $region44: #{puretran_forward.5} parent=11 // pred_fallthru
        _
      // Predicated region
      $region45: #{puretran_forward.5} parent=11 // pred_check
        %p362 = pneg %p234
      $region46: #{puretran_forward.5} parent=11 // pred_check_branch
        %364 = sbr.rel (%p362) target = $region48
      $region47: #{puretran_forward.5} parent=11 // pred_region
        _
      $region48: #{puretran_forward.5} parent=11 // pred_fallthru
        _
      // Predicated region
      $region49: #{puretran_forward.5} parent=11 // pred_check
        %p365 = pneg %p255
      $region50: #{puretran_forward.5} parent=11 // pred_check_branch
        %367 = sbr.rel (%p365) target = $region52
      $region51: #{puretran_forward.5} parent=11 // pred_region
        _
      $region52: #{puretran_forward.5} parent=11 // pred_fallthru
        _
      // Predicated region
      $region53: #{puretran_forward.5} parent=11 // pred_check
        %p368 = pneg %p276
      $region54: #{puretran_forward.5} parent=11 // pred_check_branch
        %370 = sbr.rel (%p368) target = $region56
      $region55: #{puretran_forward.5} parent=11 // pred_region
        _
      $region56: #{puretran_forward.5} parent=11 // pred_fallthru
        _
      // Predicated region
      $region57: #{puretran_forward.5} parent=11 // pred_check
        %p371 = pneg %p297
      $region58: #{puretran_forward.5} parent=11 // pred_check_branch
        %373 = sbr.rel (%p371) target = $region60
      $region59: #{puretran_forward.5} parent=11 // pred_region
        _
      $region60: #{puretran_forward.5} parent=11 // pred_fallthru
        _
    $region12: #{puretran_forward.5} parent=5 // pred_fallthru
      _
    %p374 = scmp.lt.s32.totalorder %s19, 4
    // Predicated region
    $region61: #{puretran_forward.5} parent=5 // pred_check
      %p375 = pneg %p374
    $region62: #{puretran_forward.5} parent=5 // pred_check_branch
      %377 = sbr.rel (%p375) target = $region64
    $region63: #{puretran_forward.5} parent=5 // pred_region
      // Predicated region
      $region65: #{puretran_forward.5} parent=63 // pred_check
        %p378 = pneg %p39
      $region66: #{puretran_forward.5} parent=63 // pred_check_branch
        %380 = sbr.rel (%p378) target = $region68
      $region67: #{puretran_forward.5} parent=63 // pred_region
        %p381 = scmp.lt.s32.totalorder %s19, 3
        %s382 = scalar_select %p381, %s19, 3
        %s383 = smul.addr %s382, 4
        %s384 = scalar_lea.vmem %s0, %s383
      $region68: #{puretran_forward.5} parent=63 // pred_fallthru
        _
    $region64: #{puretran_forward.5} parent=5 // pred_fallthru
      _
    %p385 = scmp.le.s32.totalorder 1, %s19
    %p386 = scmp.lt.s32.totalorder %s19, 5
    %p387 = pnand %p385, %p386
    %p388 = pneg %p387
    // Predicated region
    $region69: #{puretran_forward.5} parent=5 // pred_check
      _
    $region70: #{puretran_forward.5} parent=5 // pred_check_branch
      %390 = sbr.rel (%p387) target = $region72
    $region71: #{puretran_forward.5} parent=5 // pred_region
      %s391 = ssub.s32 %s19, 1
      %p392 = scmp.lt.s32.totalorder %s24, 3
      %s393 = scalar_select %p392, %s24, 3
      %s394 = smul.addr %s393, 4
      %s395 = scalar_lea.vmem %s0, %s394
      %p396 = pneg %p45
      %p397 = pneg %p42
      %p398 = pneg %p66
      %p399 = pneg %p63
      %p400 = pneg %p87
      %p401 = pneg %p84
      %p402 = pneg %p108
      %p403 = pneg %p105
      %p404 = pneg %p129
      %p405 = pneg %p126
      %p406 = pneg %p150
      %p407 = pneg %p147
      %p408 = pneg %p171
      %p409 = pneg %p168
      %p410 = pneg %p192
      %p411 = pneg %p189
      %p412 = pneg %p213
      %p413 = pneg %p210
      %p414 = pneg %p234
      %p415 = pneg %p231
      %p416 = pneg %p255
      %p417 = pneg %p252
      %p418 = pneg %p276
      %p419 = pneg %p273
      %p420 = pneg %p297
      %p421 = pneg %p294
      %p422 = pneg %p323
      %p423 = pneg %p320
      %p424 = scmp.lt.s32.totalorder %s24, 3
      %s425 = scalar_select %p424, %s24, 3
      %s426 = smul.addr %s425, 4
      %s427 = scalar_lea.vmem %s13, %s426
      %p428 = scmp.lt.s32.totalorder %s24, 3
      %s429 = scalar_select %p428, %s24, 3
      %s430 = smul.addr %s429, 4
      %s431 = scalar_lea.vmem %s0, %s430
      %p432 = scmp.lt.s32.totalorder %s24, 3
      %s433 = scalar_select %p432, %s24, 3
      %s434 = smul.addr %s433, 4
      %s435 = scalar_lea.vmem %s13, %s434
      %v437 = vld [vmem:[%s431] sm:$0xf]
      %v438 = vunpack.c.l.bf16 %v437
      %v439 = vld [vmem:[%s1] sm:$0xf]
      %v440 = vld [vmem:[%s1 + $0x4] sm:$0xf]
      %v441 = vld [vmem:[%s1 + $0x8] sm:$0xf]
      %v442 = vld [vmem:[%s1 + $0xc] sm:$0xf]
      %v443 = vld [vmem:[%s1 + $0x10] sm:$0xf]
      %v444 = vld [vmem:[%s1 + $0x14] sm:$0xf]
      %v445 = vld [vmem:[%s1 + $0x18] sm:$0xf]
      %v446 = vld [vmem:[%s1 + $0x1c] sm:$0xf]
      %v447 = vld [vmem:[%s1 + $0x20] sm:$0xf]
      %v448 = vld [vmem:[%s1 + $0x24] sm:$0xf]
      %v449 = vld [vmem:[%s1 + $0x28] sm:$0xf]
      %v450 = vld [vmem:[%s1 + $0x2c] sm:$0xf]
      %v451 = vld [vmem:[%s2] sm:$0x1]
      %v453 = vlaneseq
      %v454 = vshrl.u32 %v453, 7
      %v455 = vsub.s32 0, %v454
      %v456 = vrot.slane %v451, %v455
      %v470 = vunpack.c.l.b16 %v439
      %v471 = vunpack.c.l.b16 %v440
      %v472 = vunpack.c.l.b16 %v441
      %v473 = vunpack.c.l.b16 %v442
      %v474 = vunpack.c.l.b16 %v443
      %v475 = vunpack.c.l.b16 %v444
      %v476 = vunpack.c.l.b16 %v445
      %v477 = vunpack.c.l.b16 %v446
      %v478 = vunpack.c.l.b16 %v447
      %v479 = vunpack.c.l.b16 %v448
      %v480 = vunpack.c.l.b16 %v449
      %v481 = vunpack.c.l.b16 %v450
      %v482 = vpack.c.b16 %v471, %v470
      %v483 = vpack.c.b16 %v473, %v472
      %v484 = vpack.c.b16 %v475, %v474
      %v485 = vpack.c.b16 %v477, %v476
      %v486 = vpack.c.b16 %v479, %v478
      %v487 = vpack.c.b16 %v481, %v480
      %vm488 = vcmask 261120
      %v490 = vsel %vm488, %v437, 0
      %v493 = vsel %vm488, %v482, 0
      %v496 = vsel %vm488, %v483, 0
      %v499 = vsel %vm488, %v484, 0
      %v502 = vsel %vm488, %v485, 0
      %v505 = vsel %vm488, %v486, 0
      %v508 = vsel %vm488, %v487, 0
      %510 = vmatprep.subr.bf16.mxu0 0
      %511 = vmatpush1.bf16.xpose.msra.mxu0 0
      %512 = vmatprep.subr.bf16.mxu0 0
      %513 = vmatpush1.bf16.xpose.msra.mxu0 0
      %514 = vmatprep.subr.bf16.mxu0 0
      %515 = vmatpush1.bf16.xpose.msra.mxu0 %v508
      %516 = vmatprep.subr.bf16.mxu0 0
      %517 = vmatpush1.bf16.xpose.msra.mxu0 %v505
      %518 = vmatprep.subr.bf16.mxu0 0
      %519 = vmatpush1.bf16.xpose.msra.mxu0 %v502
      %520 = vmatprep.subr.bf16.mxu0 0
      %521 = vmatpush1.bf16.xpose.msra.mxu0 %v499
      %522 = vmatprep.subr.bf16.mxu0 0
      %523 = vmatpush1.bf16.xpose.msra.mxu0 %v496
      %524 = vmatprep.subr.bf16.mxu0 0
      %525 = vmatpush1.bf16.xpose.msra.mxu0 %v493
      %526 = vmatprep.subr.bf16.mxu0 0
      %527 = vmatpush2.bf16.xpose.msra.mxu0 0
      %528 = vmatprep.subr.bf16.mxu0 0
      %529 = vmatpush2.bf16.xpose.msra.mxu0 0
      %530 = vmatprep.subr.bf16.mxu0 0
      %531 = vmatpush2.bf16.xpose.msra.mxu0 0
      %532 = vmatprep.subr.bf16.mxu0 0
      %533 = vmatpush2.bf16.xpose.msra.mxu0 0
      %534 = vmatprep.subr.bf16.mxu0 0
      %535 = vmatpush2.bf16.xpose.msra.mxu0 0
      %536 = vmatprep.subr.bf16.mxu0 0
      %537 = vmatpush2.bf16.xpose.msra.mxu0 0
      %538 = vmatprep.subr.bf16.mxu0 0
      %539 = vmatpush2.bf16.xpose.msra.mxu0 0
      %540 = vmatprep.subr.bf16.mxu0 0
      %541 = vmatpush2.bf16.xpose.msra.mxu0 0
      %542 = vmatprep.mubr.bf16.mxu0 0
      %543 = vmatmul.mubr.bf16.gmra.mxu0 %v490
      %v544 = vpop.f32.mrf.mxu0
      %v545 = vadd.f32 %v456, %v544
      %v546 = vpop.f32.mrf.mxu0
      %v547 = vpop.f32.mrf.mxu0
      %v548 = vpop.f32.mrf.mxu0
      %549 = vdwg.mxu0
      %v550 = vpack.c.bf16 %v545, %v545
      %552 = vrot.lane.b32.xlu0 %v550, 96
      %v553 = vpop.permute.xlu0 %552
      %vm554 = vcmask 64512
      %v556 = vsel %vm554, %v550, 0
      %v559 = vsel %vm554, %v553, 0
      %561 = vmatprep.subr.bf16.mxu0 0
      %562 = vmatpush1.bf16.xpose.msra.mxu0 0
      %563 = vmatprep.subr.bf16.mxu0 0
      %564 = vmatpush1.bf16.xpose.msra.mxu0 0
      %565 = vmatprep.subr.bf16.mxu0 0
      %566 = vmatpush1.bf16.xpose.msra.mxu0 0
      %567 = vmatprep.subr.bf16.mxu0 0
      %568 = vmatpush1.bf16.xpose.msra.mxu0 0
      %569 = vmatprep.subr.bf16.mxu0 0
      %570 = vmatpush1.bf16.xpose.msra.mxu0 0
      %571 = vmatprep.subr.bf16.mxu0 0
      %572 = vmatpush1.bf16.xpose.msra.mxu0 0
      %573 = vmatprep.subr.bf16.mxu0 0
      %574 = vmatpush1.bf16.xpose.msra.mxu0 0
      %575 = vmatprep.subr.bf16.mxu0 0
      %576 = vmatpush1.bf16.xpose.msra.mxu0 %v559
      %577 = vmatprep.subr.bf16.mxu0 0
      %578 = vmatpush2.bf16.xpose.msra.mxu0 0
      %579 = vmatprep.subr.bf16.mxu0 0
      %580 = vmatpush2.bf16.xpose.msra.mxu0 0
      %581 = vmatprep.subr.bf16.mxu0 0
      %582 = vmatpush2.bf16.xpose.msra.mxu0 0
      %583 = vmatprep.subr.bf16.mxu0 0
      %584 = vmatpush2.bf16.xpose.msra.mxu0 0
      %585 = vmatprep.subr.bf16.mxu0 0
      %586 = vmatpush2.bf16.xpose.msra.mxu0 0
      %587 = vmatprep.subr.bf16.mxu0 0
      %588 = vmatpush2.bf16.xpose.msra.mxu0 0
      %589 = vmatprep.subr.bf16.mxu0 0
      %590 = vmatpush2.bf16.xpose.msra.mxu0 0
      %591 = vmatprep.subr.bf16.mxu0 0
      %592 = vmatpush2.bf16.xpose.msra.mxu0 0
      %593 = vmatprep.mubr.bf16.mxu0 0
      %594 = vmatmul.mubr.bf16.gmra.mxu0 %v556
      %v595 = vpop.f32.mrf.mxu0
      %v596 = vadd.f32 0.0, %v595
      %v597 = vpop.f32.mrf.mxu0
      %v598 = vpop.f32.mrf.mxu0
      %v599 = vpop.f32.mrf.mxu0
      %600 = vdwg.mxu0
      %v601 = vsel %vm554, %v596, -inf
      %602 = vmax.xlane.f32.xlu0 %v601
      %v603 = vpop.xlane.xlu0 %602
      %v604 = vsub.f32 %v596, %v603
      %v605 = vmul.f32 %v604, 1.442695
      %v606 = vpow.pop %v605
      %v607 = vsel %vm554, %v606, 0.0
      %608 = vadd.xlane.f32.xlu0 %v607
      %v609 = vpop.xlane.xlu0 %608
      %v610 = vrcp.pop %v609
      %v611 = vmul.f32 %v606, %v610
      %v612 = vpack.c.bf16 %v611, %v611
      %613 = vrot.lane.b32.xlu0 %v550, 64
      %v614 = vpop.permute.xlu0 %613
      %v616 = vsel %vm554, %v612, 0
      %vm618 = vcmask 1043456
      %v620 = vsel %vm618, %v614, 0
      %622 = vmatprep.subr.bf16.mxu0 0
      %623 = vmatpush1.bf16.msra.mxu0 0
      %624 = vmatprep.subr.bf16.mxu0 0
      %625 = vmatpush1.bf16.msra.mxu0 0
      %626 = vmatprep.subr.bf16.mxu0 0
      %627 = vmatpush1.bf16.msra.mxu0 0
      %628 = vmatprep.subr.bf16.mxu0 0
      %629 = vmatpush1.bf16.msra.mxu0 0
      %630 = vmatprep.subr.bf16.mxu0 0
      %631 = vmatpush1.bf16.msra.mxu0 0
      %632 = vmatprep.subr.bf16.mxu0 0
      %633 = vmatpush1.bf16.msra.mxu0 0
      %634 = vmatprep.subr.bf16.mxu0 0
      %635 = vmatpush1.bf16.msra.mxu0 0
      %636 = vmatprep.subr.bf16.mxu0 0
      %637 = vmatpush1.bf16.msra.mxu0 %v620
      %638 = vmatprep.subr.bf16.mxu0 0
      %639 = vmatpush2.bf16.msra.mxu0 0
      %640 = vmatprep.subr.bf16.mxu0 0
      %641 = vmatpush2.bf16.msra.mxu0 0
      %642 = vmatprep.subr.bf16.mxu0 0
      %643 = vmatpush2.bf16.msra.mxu0 0
      %644 = vmatprep.subr.bf16.mxu0 0
      %645 = vmatpush2.bf16.msra.mxu0 0
      %646 = vmatprep.subr.bf16.mxu0 0
      %647 = vmatpush2.bf16.msra.mxu0 0
      %648 = vmatprep.subr.bf16.mxu0 0
      %649 = vmatpush2.bf16.msra.mxu0 0
      %650 = vmatprep.subr.bf16.mxu0 0
      %651 = vmatpush2.bf16.msra.mxu0 0
      %652 = vmatprep.subr.bf16.mxu0 0
      %653 = vmatpush2.bf16.msra.mxu0 0
      %654 = vmatprep.mubr.bf16.mxu0 0
      %655 = vmatmul.mubr.bf16.gmra.mxu0 %v616
      %v656 = vpop.f32.mrf.mxu0
      %v657 = vadd.f32 0.0, %v656
      %v658 = vpop.f32.mrf.mxu0
      %v659 = vpop.f32.mrf.mxu0
      %v660 = vpop.f32.mrf.mxu0
      %661 = vdwg.mxu0
      %662 = vst.msk [vmem:[#allocation2] sm:$0xff] %vm554, %v657
      %663 = vrot.lane.b32.xlu0 %v550, 120
      %v664 = vpop.permute.xlu0 %663
      %665 = vrot.lane.b32.xlu0 %v550, 88
      %v666 = vpop.permute.xlu0 %665
      %v668 = vsel %vm554, %v664, 0
      %v671 = vsel %vm554, %v666, 0
      %673 = vmatprep.subr.bf16.mxu0 0
      %674 = vmatpush1.bf16.xpose.msra.mxu0 0
      %675 = vmatprep.subr.bf16.mxu0 0
      %676 = vmatpush1.bf16.xpose.msra.mxu0 0
      %677 = vmatprep.subr.bf16.mxu0 0
      %678 = vmatpush1.bf16.xpose.msra.mxu0 0
      %679 = vmatprep.subr.bf16.mxu0 0
      %680 = vmatpush1.bf16.xpose.msra.mxu0 0
      %681 = vmatprep.subr.bf16.mxu0 0
      %682 = vmatpush1.bf16.xpose.msra.mxu0 0
      %683 = vmatprep.subr.bf16.mxu0 0
      %684 = vmatpush1.bf16.xpose.msra.mxu0 0
      %685 = vmatprep.subr.bf16.mxu0 0
      %686 = vmatpush1.bf16.xpose.msra.mxu0 0
      %687 = vmatprep.subr.bf16.mxu0 0
      %688 = vmatpush1.bf16.xpose.msra.mxu0 %v671
      %689 = vmatprep.subr.bf16.mxu0 0
      %690 = vmatpush2.bf16.xpose.msra.mxu0 0
      %691 = vmatprep.subr.bf16.mxu0 0
      %692 = vmatpush2.bf16.xpose.msra.mxu0 0
      %693 = vmatprep.subr.bf16.mxu0 0
      %694 = vmatpush2.bf16.xpose.msra.mxu0 0
      %695 = vmatprep.subr.bf16.mxu0 0
      %696 = vmatpush2.bf16.xpose.msra.mxu0 0
      %697 = vmatprep.subr.bf16.mxu0 0
      %698 = vmatpush2.bf16.xpose.msra.mxu0 0
      %699 = vmatprep.subr.bf16.mxu0 0
      %700 = vmatpush2.bf16.xpose.msra.mxu0 0
      %701 = vmatprep.subr.bf16.mxu0 0
      %702 = vmatpush2.bf16.xpose.msra.mxu0 0
      %703 = vmatprep.subr.bf16.mxu0 0
      %704 = vmatpush2.bf16.xpose.msra.mxu0 0
      %705 = vmatprep.mubr.bf16.mxu0 0
      %706 = vmatmul.mubr.bf16.gmra.mxu0 %v668
      %v707 = vpop.f32.mrf.mxu0
      %v708 = vadd.f32 0.0, %v707
      %v709 = vpop.f32.mrf.mxu0
      %v710 = vpop.f32.mrf.mxu0
      %v711 = vpop.f32.mrf.mxu0
      %712 = vdwg.mxu0
      %v713 = vsel %vm554, %v708, -inf
      %714 = vmax.xlane.f32.xlu0 %v713
      %v715 = vpop.xlane.xlu0 %714
      %v716 = vsub.f32 %v708, %v715
      %v717 = vmul.f32 %v716, 1.442695
      %v718 = vpow.pop %v717
      %v719 = vsel %vm554, %v718, 0.0
      %720 = vadd.xlane.f32.xlu0 %v719
      %v721 = vpop.xlane.xlu0 %720
      %v722 = vrcp.pop %v721
      %v723 = vmul.f32 %v718, %v722
      %v724 = vpack.c.bf16 %v723, %v723
      %725 = vrot.lane.b32.xlu0 %v550, 56
      %v726 = vpop.permute.xlu0 %725
      %v728 = vsel %vm554, %v724, 0
      %v731 = vsel %vm618, %v726, 0
      %733 = vmatprep.subr.bf16.mxu0 0
      %734 = vmatpush1.bf16.msra.mxu0 0
      %735 = vmatprep.subr.bf16.mxu0 0
      %736 = vmatpush1.bf16.msra.mxu0 0
      %737 = vmatprep.subr.bf16.mxu0 0
      %738 = vmatpush1.bf16.msra.mxu0 0
      %739 = vmatprep.subr.bf16.mxu0 0
      %740 = vmatpush1.bf16.msra.mxu0 0
      %741 = vmatprep.subr.bf16.mxu0 0
      %742 = vmatpush1.bf16.msra.mxu0 0
      %743 = vmatprep.subr.bf16.mxu0 0
      %744 = vmatpush1.bf16.msra.mxu0 0
      %745 = vmatprep.subr.bf16.mxu0 0
      %746 = vmatpush1.bf16.msra.mxu0 0
      %747 = vmatprep.subr.bf16.mxu0 0
      %748 = vmatpush1.bf16.msra.mxu0 %v731
      %749 = vmatprep.subr.bf16.mxu0 0
      %750 = vmatpush2.bf16.msra.mxu0 0
      %751 = vmatprep.subr.bf16.mxu0 0
      %752 = vmatpush2.bf16.msra.mxu0 0
      %753 = vmatprep.subr.bf16.mxu0 0
      %754 = vmatpush2.bf16.msra.mxu0 0
      %755 = vmatprep.subr.bf16.mxu0 0
      %756 = vmatpush2.bf16.msra.mxu0 0
      %757 = vmatprep.subr.bf16.mxu0 0
      %758 = vmatpush2.bf16.msra.mxu0 0
      %759 = vmatprep.subr.bf16.mxu0 0
      %760 = vmatpush2.bf16.msra.mxu0 0
      %761 = vmatprep.subr.bf16.mxu0 0
      %762 = vmatpush2.bf16.msra.mxu0 0
      %763 = vmatprep.subr.bf16.mxu0 0
      %764 = vmatpush2.bf16.msra.mxu0 0
      %765 = vmatprep.mubr.bf16.mxu0 0
      %766 = vmatmul.mubr.bf16.gmra.mxu0 %v728
      %v767 = vpop.f32.mrf.mxu0
      %v768 = vadd.f32 0.0, %v767
      %v769 = vpop.f32.mrf.mxu0
      %v770 = vpop.f32.mrf.mxu0
      %v771 = vpop.f32.mrf.mxu0
      %772 = vdwg.mxu0
      %774 = vrot.lane.b32.xlu0 %v768, 8
      %v775 = vpop.permute.xlu0 %774
      %vm777 = vcmask 130112
      %778 = vst.msk [vmem:[#allocation2] sm:$0xff] %vm777, %v775
      %779 = vrot.lane.b32.xlu0 %v550, 112
      %v780 = vpop.permute.xlu0 %779
      %781 = vrot.lane.b32.xlu0 %v550, 80
      %v782 = vpop.permute.xlu0 %781
      %v784 = vsel %vm554, %v780, 0
      %v787 = vsel %vm554, %v782, 0
      %789 = vmatprep.subr.bf16.mxu0 0
      %790 = vmatpush1.bf16.xpose.msra.mxu0 0
      %791 = vmatprep.subr.bf16.mxu0 0
      %792 = vmatpush1.bf16.xpose.msra.mxu0 0
      %793 = vmatprep.subr.bf16.mxu0 0
      %794 = vmatpush1.bf16.xpose.msra.mxu0 0
      %795 = vmatprep.subr.bf16.mxu0 0
      %796 = vmatpush1.bf16.xpose.msra.mxu0 0
      %797 = vmatprep.subr.bf16.mxu0 0
      %798 = vmatpush1.bf16.xpose.msra.mxu0 0
      %799 = vmatprep.subr.bf16.mxu0 0
      %800 = vmatpush1.bf16.xpose.msra.mxu0 0
      %801 = vmatprep.subr.bf16.mxu0 0
      %802 = vmatpush1.bf16.xpose.msra.mxu0 0
      %803 = vmatprep.subr.bf16.mxu0 0
      %804 = vmatpush1.bf16.xpose.msra.mxu0 %v787
      %805 = vmatprep.subr.bf16.mxu0 0
      %806 = vmatpush2.bf16.xpose.msra.mxu0 0
      %807 = vmatprep.subr.bf16.mxu0 0
      %808 = vmatpush2.bf16.xpose.msra.mxu0 0
      %809 = vmatprep.subr.bf16.mxu0 0
      %810 = vmatpush2.bf16.xpose.msra.mxu0 0
      %811 = vmatprep.subr.bf16.mxu0 0
      %812 = vmatpush2.bf16.xpose.msra.mxu0 0
      %813 = vmatprep.subr.bf16.mxu0 0
      %814 = vmatpush2.bf16.xpose.msra.mxu0 0
      %815 = vmatprep.subr.bf16.mxu0 0
      %816 = vmatpush2.bf16.xpose.msra.mxu0 0
      %817 = vmatprep.subr.bf16.mxu0 0
      %818 = vmatpush2.bf16.xpose.msra.mxu0 0
      %819 = vmatprep.subr.bf16.mxu0 0
      %820 = vmatpush2.bf16.xpose.msra.mxu0 0
      %821 = vmatprep.mubr.bf16.mxu0 0
      %822 = vmatmul.mubr.bf16.gmra.mxu0 %v784
      %v823 = vpop.f32.mrf.mxu0
      %v824 = vadd.f32 0.0, %v823
      %v825 = vpop.f32.mrf.mxu0
      %v826 = vpop.f32.mrf.mxu0
      %v827 = vpop.f32.mrf.mxu0
      %828 = vdwg.mxu0
      %v829 = vsel %vm554, %v824, -inf
      %830 = vmax.xlane.f32.xlu0 %v829
      %v831 = vpop.xlane.xlu0 %830
      %v832 = vsub.f32 %v824, %v831
      %v833 = vmul.f32 %v832, 1.442695
      %v834 = vpow.pop %v833
      %v835 = vsel %vm554, %v834, 0.0
      %836 = vadd.xlane.f32.xlu0 %v835
      %v837 = vpop.xlane.xlu0 %836
      %v838 = vrcp.pop %v837
      %v839 = vmul.f32 %v834, %v838
      %v840 = vpack.c.bf16 %v839, %v839
      %841 = vrot.lane.b32.xlu0 %v550, 48
      %v842 = vpop.permute.xlu0 %841
      %v844 = vsel %vm554, %v840, 0
      %v847 = vsel %vm618, %v842, 0
      %849 = vmatprep.subr.bf16.mxu0 0
      %850 = vmatpush1.bf16.msra.mxu0 0
      %851 = vmatprep.subr.bf16.mxu0 0
      %852 = vmatpush1.bf16.msra.mxu0 0
      %853 = vmatprep.subr.bf16.mxu0 0
      %854 = vmatpush1.bf16.msra.mxu0 0
      %855 = vmatprep.subr.bf16.mxu0 0
      %856 = vmatpush1.bf16.msra.mxu0 0
      %857 = vmatprep.subr.bf16.mxu0 0
      %858 = vmatpush1.bf16.msra.mxu0 0
      %859 = vmatprep.subr.bf16.mxu0 0
      %860 = vmatpush1.bf16.msra.mxu0 0
      %861 = vmatprep.subr.bf16.mxu0 0
      %862 = vmatpush1.bf16.msra.mxu0 0
      %863 = vmatprep.subr.bf16.mxu0 0
      %864 = vmatpush1.bf16.msra.mxu0 %v847
      %865 = vmatprep.subr.bf16.mxu0 0
      %866 = vmatpush2.bf16.msra.mxu0 0
      %867 = vmatprep.subr.bf16.mxu0 0
      %868 = vmatpush2.bf16.msra.mxu0 0
      %869 = vmatprep.subr.bf16.mxu0 0
      %870 = vmatpush2.bf16.msra.mxu0 0
      %871 = vmatprep.subr.bf16.mxu0 0
      %872 = vmatpush2.bf16.msra.mxu0 0
      %873 = vmatprep.subr.bf16.mxu0 0
      %874 = vmatpush2.bf16.msra.mxu0 0
      %875 = vmatprep.subr.bf16.mxu0 0
      %876 = vmatpush2.bf16.msra.mxu0 0
      %877 = vmatprep.subr.bf16.mxu0 0
      %878 = vmatpush2.bf16.msra.mxu0 0
      %879 = vmatprep.subr.bf16.mxu0 0
      %880 = vmatpush2.bf16.msra.mxu0 0
      %881 = vmatprep.mubr.bf16.mxu0 0
      %882 = vmatmul.mubr.bf16.gmra.mxu0 %v844
      %v883 = vpop.f32.mrf.mxu0
      %v884 = vadd.f32 0.0, %v883
      %v885 = vpop.f32.mrf.mxu0
      %v886 = vpop.f32.mrf.mxu0
      %v887 = vpop.f32.mrf.mxu0
      %888 = vdwg.mxu0
      %890 = vrot.lane.b32.xlu0 %v884, 16
      %v891 = vpop.permute.xlu0 %890
      %vm893 = vcmask 195712
      %894 = vst.msk [vmem:[#allocation2] sm:$0xff] %vm893, %v891
      %895 = vrot.lane.b32.xlu0 %v550, 104
      %v896 = vpop.permute.xlu0 %895
      %897 = vrot.lane.b32.xlu0 %v550, 72
      %v898 = vpop.permute.xlu0 %897
      %v900 = vsel %vm554, %v896, 0
      %v903 = vsel %vm554, %v898, 0
      %905 = vmatprep.subr.bf16.mxu0 0
      %906 = vmatpush1.bf16.xpose.msra.mxu0 0
      %907 = vmatprep.subr.bf16.mxu0 0
      %908 = vmatpush1.bf16.xpose.msra.mxu0 0
      %909 = vmatprep.subr.bf16.mxu0 0
      %910 = vmatpush1.bf16.xpose.msra.mxu0 0
      %911 = vmatprep.subr.bf16.mxu0 0
      %912 = vmatpush1.bf16.xpose.msra.mxu0 0
      %913 = vmatprep.subr.bf16.mxu0 0
      %914 = vmatpush1.bf16.xpose.msra.mxu0 0
      %915 = vmatprep.subr.bf16.mxu0 0
      %916 = vmatpush1.bf16.xpose.msra.mxu0 0
      %917 = vmatprep.subr.bf16.mxu0 0
      %918 = vmatpush1.bf16.xpose.msra.mxu0 0
      %919 = vmatprep.subr.bf16.mxu0 0
      %920 = vmatpush1.bf16.xpose.msra.mxu0 %v903
      %921 = vmatprep.subr.bf16.mxu0 0
      %922 = vmatpush2.bf16.xpose.msra.mxu0 0
      %923 = vmatprep.subr.bf16.mxu0 0
      %924 = vmatpush2.bf16.xpose.msra.mxu0 0
      %925 = vmatprep.subr.bf16.mxu0 0
      %926 = vmatpush2.bf16.xpose.msra.mxu0 0
      %927 = vmatprep.subr.bf16.mxu0 0
      %928 = vmatpush2.bf16.xpose.msra.mxu0 0
      %929 = vmatprep.subr.bf16.mxu0 0
      %930 = vmatpush2.bf16.xpose.msra.mxu0 0
      %931 = vmatprep.subr.bf16.mxu0 0
      %932 = vmatpush2.bf16.xpose.msra.mxu0 0
      %933 = vmatprep.subr.bf16.mxu0 0
      %934 = vmatpush2.bf16.xpose.msra.mxu0 0
      %935 = vmatprep.subr.bf16.mxu0 0
      %936 = vmatpush2.bf16.xpose.msra.mxu0 0
      %937 = vmatprep.mubr.bf16.mxu0 0
      %938 = vmatmul.mubr.bf16.gmra.mxu0 %v900
      %v939 = vpop.f32.mrf.mxu0
      %v940 = vadd.f32 0.0, %v939
      %v941 = vpop.f32.mrf.mxu0
      %v942 = vpop.f32.mrf.mxu0
      %v943 = vpop.f32.mrf.mxu0
      %944 = vdwg.mxu0
      %v945 = vsel %vm554, %v940, -inf
      %946 = vmax.xlane.f32.xlu0 %v945
      %v947 = vpop.xlane.xlu0 %946
      %v948 = vsub.f32 %v940, %v947
      %v949 = vmul.f32 %v948, 1.442695
      %v950 = vpow.pop %v949
      %v951 = vsel %vm554, %v950, 0.0
      %952 = vadd.xlane.f32.xlu0 %v951
      %v953 = vpop.xlane.xlu0 %952
      %v954 = vrcp.pop %v953
      %v955 = vmul.f32 %v950, %v954
      %v956 = vpack.c.bf16 %v955, %v955
      %957 = vrot.lane.b32.xlu0 %v550, 40
      %v958 = vpop.permute.xlu0 %957
      %v960 = vsel %vm554, %v956, 0
      %v963 = vsel %vm618, %v958, 0
      %965 = vmatprep.subr.bf16.mxu0 0
      %966 = vmatpush1.bf16.msra.mxu0 0
      %967 = vmatprep.subr.bf16.mxu0 0
      %968 = vmatpush1.bf16.msra.mxu0 0
      %969 = vmatprep.subr.bf16.mxu0 0
      %970 = vmatpush1.bf16.msra.mxu0 0
      %971 = vmatprep.subr.bf16.mxu0 0
      %972 = vmatpush1.bf16.msra.mxu0 0
      %973 = vmatprep.subr.bf16.mxu0 0
      %974 = vmatpush1.bf16.msra.mxu0 0
      %975 = vmatprep.subr.bf16.mxu0 0
      %976 = vmatpush1.bf16.msra.mxu0 0
      %977 = vmatprep.subr.bf16.mxu0 0
      %978 = vmatpush1.bf16.msra.mxu0 0
      %979 = vmatprep.subr.bf16.mxu0 0
      %980 = vmatpush1.bf16.msra.mxu0 %v963
      %981 = vmatprep.subr.bf16.mxu0 0
      %982 = vmatpush2.bf16.msra.mxu0 0
      %983 = vmatprep.subr.bf16.mxu0 0
      %984 = vmatpush2.bf16.msra.mxu0 0
      %985 = vmatprep.subr.bf16.mxu0 0
      %986 = vmatpush2.bf16.msra.mxu0 0
      %987 = vmatprep.subr.bf16.mxu0 0
      %988 = vmatpush2.bf16.msra.mxu0 0
      %989 = vmatprep.subr.bf16.mxu0 0
      %990 = vmatpush2.bf16.msra.mxu0 0
      %991 = vmatprep.subr.bf16.mxu0 0
      %992 = vmatpush2.bf16.msra.mxu0 0
      %993 = vmatprep.subr.bf16.mxu0 0
      %994 = vmatpush2.bf16.msra.mxu0 0
      %995 = vmatprep.subr.bf16.mxu0 0
      %996 = vmatpush2.bf16.msra.mxu0 0
      %997 = vmatprep.mubr.bf16.mxu0 0
      %998 = vmatmul.mubr.bf16.gmra.mxu0 %v960
      %v999 = vpop.f32.mrf.mxu0
      %v1000 = vadd.f32 0.0, %v999
      %v1001 = vpop.f32.mrf.mxu0
      %v1002 = vpop.f32.mrf.mxu0
      %v1003 = vpop.f32.mrf.mxu0
      %1004 = vdwg.mxu0
      %1006 = vrot.lane.b32.xlu0 %v1000, 24
      %v1007 = vpop.permute.xlu0 %1006
      %vm1009 = vcmask 261312
      %1010 = vst.msk [vmem:[#allocation2] sm:$0xff] %vm1009, %v1007
      %v1011 = vld [vmem:[#allocation2] sm:$0xff]
      %v1012 = vpack.c.bf16 %v1011, %v1011
      %v1013 = vld [vmem:[%s3] sm:$0xf]
      %v1014 = vld [vmem:[%s3 + $0x4] sm:$0xf]
      %v1015 = vld [vmem:[%s3 + $0x8] sm:$0xf]
      %v1016 = vld [vmem:[%s3 + $0xc] sm:$0xf]
      %v1017 = vld [vmem:[%s4] sm:$0x1]
      %v1019 = vlaneseq
      %v1020 = vshrl.u32 %v1019, 7
      %v1021 = vsub.s32 0, %v1020
      %v1022 = vrot.slane %v1017, %v1021
      %v1028 = vunpack.c.l.b16 %v1013
      %v1029 = vunpack.c.l.b16 %v1014
      %v1030 = vunpack.c.l.b16 %v1015
      %v1031 = vunpack.c.l.b16 %v1016
      %v1032 = vpack.c.b16 %v1029, %v1028
      %v1033 = vpack.c.b16 %v1031, %v1030
      %v1035 = vsel %vm488, %v1012, 0
      %v1038 = vsel %vm488, %v1032, 0
      %v1041 = vsel %vm488, %v1033, 0
      %1043 = vmatprep.subr.bf16.mxu0 0
      %1044 = vmatpush1.bf16.xpose.msra.mxu0 0
      %1045 = vmatprep.subr.bf16.mxu0 0
      %1046 = vmatpush1.bf16.xpose.msra.mxu0 0
      %1047 = vmatprep.subr.bf16.mxu0 0
      %1048 = vmatpush1.bf16.xpose.msra.mxu0 0
      %1049 = vmatprep.subr.bf16.mxu0 0
      %1050 = vmatpush1.bf16.xpose.msra.mxu0 0
      %1051 = vmatprep.subr.bf16.mxu0 0
      %1052 = vmatpush1.bf16.xpose.msra.mxu0 0
      %1053 = vmatprep.subr.bf16.mxu0 0
      %1054 = vmatpush1.bf16.xpose.msra.mxu0 0
      %1055 = vmatprep.subr.bf16.mxu0 0
      %1056 = vmatpush1.bf16.xpose.msra.mxu0 %v1041
      %1057 = vmatprep.subr.bf16.mxu0 0
      %1058 = vmatpush1.bf16.xpose.msra.mxu0 %v1038
      %1059 = vmatprep.subr.bf16.mxu0 0
      %1060 = vmatpush2.bf16.xpose.msra.mxu0 0
      %1061 = vmatprep.subr.bf16.mxu0 0
      %1062 = vmatpush2.bf16.xpose.msra.mxu0 0
      %1063 = vmatprep.subr.bf16.mxu0 0
      %1064 = vmatpush2.bf16.xpose.msra.mxu0 0
      %1065 = vmatprep.subr.bf16.mxu0 0
      %1066 = vmatpush2.bf16.xpose.msra.mxu0 0
      %1067 = vmatprep.subr.bf16.mxu0 0
      %1068 = vmatpush2.bf16.xpose.msra.mxu0 0
      %1069 = vmatprep.subr.bf16.mxu0 0
      %1070 = vmatpush2.bf16.xpose.msra.mxu0 0
      %1071 = vmatprep.subr.bf16.mxu0 0
      %1072 = vmatpush2.bf16.xpose.msra.mxu0 0
      %1073 = vmatprep.subr.bf16.mxu0 0
      %1074 = vmatpush2.bf16.xpose.msra.mxu0 0
      %1075 = vmatprep.mubr.bf16.mxu0 0
      %1076 = vmatmul.mubr.bf16.gmra.mxu0 %v1035
      %v1077 = vpop.f32.mrf.mxu0
      %v1078 = vadd.f32 %v1022, %v1077
      %v1079 = vpop.f32.mrf.mxu0
      %v1080 = vpop.f32.mrf.mxu0
      %v1081 = vpop.f32.mrf.mxu0
      %1082 = vdwg.mxu0
      %v1083 = vadd.f32 %v438, %v1078
      %v1084 = vsel %vm488, %v1083, 0.0
      %1085 = vadd.xlane.f32.xlu0 %v1084
      %v1086 = vpop.xlane.xlu0 %1085
      %v1087 = vrcp.pop 32.0
      %v1088 = vmul.f32 %v1086, %v1087
      %v1089 = vsub.f32 %v1083, %v1088
      %v1090 = vmul.f32 %v1089, %v1089
      %v1091 = vsel %vm488, %v1090, 0.0
      %1092 = vadd.xlane.f32.xlu0 %v1091
      %v1093 = vpop.xlane.xlu0 %1092
      %v1094 = vmul.f32 %v1093, %v1087
      %v1095 = vadd.f32 %v1094, 1e-05
      %v1096 = vrsqrt.pop %v1095
      %v1097 = vmul.f32 %v1089, %v1096
      %v1098 = vld [vmem:[%s5] sm:$0x1]
      %v1100 = vlaneseq
      %v1101 = vshrl.u32 %v1100, 7
      %v1102 = vsub.s32 0, %v1101
      %v1103 = vrot.slane %v1098, %v1102
      %v1105 = vmul.f32 %v1097, %v1103
      %v1106 = vld [vmem:[%s6] sm:$0x1]
      %v1108 = vlaneseq
      %v1109 = vshrl.u32 %v1108, 7
      %v1110 = vsub.s32 0, %v1109
      %v1111 = vrot.slane %v1106, %v1110
      %v1113 = vadd.f32 %v1105, %v1111
      %v1114 = vpack.c.bf16 %v1113, %v1113
      %v1115 = vld [vmem:[%s7] sm:$0xf]
      %v1116 = vld [vmem:[%s7 + $0x4] sm:$0xf]
      %v1117 = vld [vmem:[%s7 + $0x8] sm:$0xf]
      %v1118 = vld [vmem:[%s7 + $0xc] sm:$0xf]
      %v1119 = vld [vmem:[%s7 + $0x10] sm:$0xf]
      %v1120 = vld [vmem:[%s7 + $0x14] sm:$0xf]
      %v1121 = vld [vmem:[%s7 + $0x18] sm:$0xf]
      %v1122 = vld [vmem:[%s7 + $0x1c] sm:$0xf]
      %v1123 = vld [vmem:[%s8] sm:$0x1]
      %v1125 = vlaneseq
      %v1126 = vshrl.u32 %v1125, 7
      %v1127 = vsub.s32 0, %v1126
      %v1128 = vrot.slane %v1123, %v1127
      %v1138 = vunpack.c.l.b16 %v1115
      %v1139 = vunpack.c.l.b16 %v1116
      %v1140 = vunpack.c.l.b16 %v1117
      %v1141 = vunpack.c.l.b16 %v1118
      %v1142 = vunpack.c.l.b16 %v1119
      %v1143 = vunpack.c.l.b16 %v1120
      %v1144 = vunpack.c.l.b16 %v1121
      %v1145 = vunpack.c.l.b16 %v1122
      %v1146 = vpack.c.b16 %v1139, %v1138
      %v1147 = vpack.c.b16 %v1141, %v1140
      %v1148 = vpack.c.b16 %v1143, %v1142
      %v1149 = vpack.c.b16 %v1145, %v1144
      %v1151 = vsel %vm488, %v1114, 0
      %v1154 = vsel %vm488, %v1146, 0
      %v1157 = vsel %vm488, %v1147, 0
      %v1160 = vsel %vm488, %v1148, 0
      %v1163 = vsel %vm488, %v1149, 0
      %1165 = vmatprep.subr.bf16.mxu0 0
      %1166 = vmatpush1.bf16.xpose.msra.mxu0 0
      %1167 = vmatprep.subr.bf16.mxu0 0
      %1168 = vmatpush1.bf16.xpose.msra.mxu0 0
      %1169 = vmatprep.subr.bf16.mxu0 0
      %1170 = vmatpush1.bf16.xpose.msra.mxu0 0
      %1171 = vmatprep.subr.bf16.mxu0 0
      %1172 = vmatpush1.bf16.xpose.msra.mxu0 0
      %1173 = vmatprep.subr.bf16.mxu0 0
      %1174 = vmatpush1.bf16.xpose.msra.mxu0 %v1163
      %1175 = vmatprep.subr.bf16.mxu0 0
      %1176 = vmatpush1.bf16.xpose.msra.mxu0 %v1160
      %1177 = vmatprep.subr.bf16.mxu0 0
      %1178 = vmatpush1.bf16.xpose.msra.mxu0 %v1157
      %1179 = vmatprep.subr.bf16.mxu0 0
      %1180 = vmatpush1.bf16.xpose.msra.mxu0 %v1154
      %1181 = vmatprep.subr.bf16.mxu0 0
      %1182 = vmatpush2.bf16.xpose.msra.mxu0 0
      %1183 = vmatprep.subr.bf16.mxu0 0
      %1184 = vmatpush2.bf16.xpose.msra.mxu0 0
      %1185 = vmatprep.subr.bf16.mxu0 0
      %1186 = vmatpush2.bf16.xpose.msra.mxu0 0
      %1187 = vmatprep.subr.bf16.mxu0 0
      %1188 = vmatpush2.bf16.xpose.msra.mxu0 0
      %1189 = vmatprep.subr.bf16.mxu0 0
      %1190 = vmatpush2.bf16.xpose.msra.mxu0 0
      %1191 = vmatprep.subr.bf16.mxu0 0
      %1192 = vmatpush2.bf16.xpose.msra.mxu0 0
      %1193 = vmatprep.subr.bf16.mxu0 0
      %1194 = vmatpush2.bf16.xpose.msra.mxu0 0
      %1195 = vmatprep.subr.bf16.mxu0 0
      %1196 = vmatpush2.bf16.xpose.msra.mxu0 0
      %1197 = vmatprep.mubr.bf16.mxu0 0
      %1198 = vmatmul.mubr.bf16.gmra.mxu0 %v1151
      %v1199 = vpop.f32.mrf.mxu0
      %v1200 = vadd.f32 %v1128, %v1199
      %v1201 = vpop.f32.mrf.mxu0
      %v1202 = vpop.f32.mrf.mxu0
      %v1203 = vpop.f32.mrf.mxu0
      %1204 = vdwg.mxu0
      %v1205 = vmax.f32 %v1200, 0.0
      %v1206 = vpack.c.bf16 %v1205, %v1205
      %v1207 = vld [vmem:[%s9] sm:$0xf]
      %v1208 = vld [vmem:[%s9 + $0x4] sm:$0xf]
      %v1209 = vld [vmem:[%s9 + $0x8] sm:$0xf]
      %v1210 = vld [vmem:[%s9 + $0xc] sm:$0xf]
      %v1211 = vld [vmem:[%s10] sm:$0x1]
      %v1213 = vlaneseq
      %v1214 = vshrl.u32 %v1213, 7
      %v1215 = vsub.s32 0, %v1214
      %v1216 = vrot.slane %v1211, %v1215
      %v1222 = vunpack.c.l.b16 %v1207
      %v1223 = vunpack.c.l.b16 %v1208
      %v1224 = vunpack.c.l.b16 %v1209
      %v1225 = vunpack.c.l.b16 %v1210
      %v1226 = vpack.c.b16 %v1223, %v1222
      %v1227 = vpack.c.b16 %v1225, %v1224
      %vm1228 = vcmask 523264
      %v1230 = vsel %vm1228, %v1206, 0
      %v1233 = vsel %vm1228, %v1226, 0
      %v1236 = vsel %vm1228, %v1227, 0
      %1238 = vmatprep.subr.bf16.mxu0 0
      %1239 = vmatpush1.bf16.xpose.msra.mxu0 0
      %1240 = vmatprep.subr.bf16.mxu0 0
      %1241 = vmatpush1.bf16.xpose.msra.mxu0 0
      %1242 = vmatprep.subr.bf16.mxu0 0
      %1243 = vmatpush1.bf16.xpose.msra.mxu0 0
      %1244 = vmatprep.subr.bf16.mxu0 0
      %1245 = vmatpush1.bf16.xpose.msra.mxu0 0
      %1246 = vmatprep.subr.bf16.mxu0 0
      %1247 = vmatpush1.bf16.xpose.msra.mxu0 0
      %1248 = vmatprep.subr.bf16.mxu0 0
      %1249 = vmatpush1.bf16.xpose.msra.mxu0 0
      %1250 = vmatprep.subr.bf16.mxu0 0
      %1251 = vmatpush1.bf16.xpose.msra.mxu0 %v1236
      %1252 = vmatprep.subr.bf16.mxu0 0
      %1253 = vmatpush1.bf16.xpose.msra.mxu0 %v1233
      %1254 = vmatprep.subr.bf16.mxu0 0
      %1255 = vmatpush2.bf16.xpose.msra.mxu0 0
      %1256 = vmatprep.subr.bf16.mxu0 0
      %1257 = vmatpush2.bf16.xpose.msra.mxu0 0
      %1258 = vmatprep.subr.bf16.mxu0 0
      %1259 = vmatpush2.bf16.xpose.msra.mxu0 0
      %1260 = vmatprep.subr.bf16.mxu0 0
      %1261 = vmatpush2.bf16.xpose.msra.mxu0 0
      %1262 = vmatprep.subr.bf16.mxu0 0
      %1263 = vmatpush2.bf16.xpose.msra.mxu0 0
      %1264 = vmatprep.subr.bf16.mxu0 0
      %1265 = vmatpush2.bf16.xpose.msra.mxu0 0
      %1266 = vmatprep.subr.bf16.mxu0 0
      %1267 = vmatpush2.bf16.xpose.msra.mxu0 0
      %1268 = vmatprep.subr.bf16.mxu0 0
      %1269 = vmatpush2.bf16.xpose.msra.mxu0 0
      %1270 = vmatprep.mubr.bf16.mxu0 0
      %1271 = vmatmul.mubr.bf16.gmra.mxu0 %v1230
      %v1272 = vpop.f32.mrf.mxu0
      %v1273 = vadd.f32 %v1216, %v1272
      %v1274 = vpop.f32.mrf.mxu0
      %v1275 = vpop.f32.mrf.mxu0
      %v1276 = vpop.f32.mrf.mxu0
      %1277 = vdwg.mxu0
      %v1278 = vadd.f32 %v1113, %v1273
      %v1279 = vsel %vm488, %v1278, 0.0
      %1280 = vadd.xlane.f32.xlu0 %v1279
      %v1281 = vpop.xlane.xlu0 %1280
      %v1282 = vmul.f32 %v1281, %v1087
      %v1283 = vsub.f32 %v1278, %v1282
      %v1284 = vmul.f32 %v1283, %v1283
      %v1285 = vsel %vm488, %v1284, 0.0
      %1286 = vadd.xlane.f32.xlu0 %v1285
      %v1287 = vpop.xlane.xlu0 %1286
      %v1288 = vmul.f32 %v1287, %v1087
      %v1289 = vadd.f32 %v1288, 1e-05
      %v1290 = vrsqrt.pop %v1289
      %v1291 = vmul.f32 %v1283, %v1290
      %v1292 = vld [vmem:[%s11] sm:$0x1]
      %v1294 = vlaneseq
      %v1295 = vshrl.u32 %v1294, 7
      %v1296 = vsub.s32 0, %v1295
      %v1297 = vrot.slane %v1292, %v1296
      %v1299 = vmul.f32 %v1291, %v1297
      %v1300 = vld [vmem:[%s12] sm:$0x1]
      %v1302 = vlaneseq
      %v1303 = vshrl.u32 %v1302, 7
      %v1304 = vsub.s32 0, %v1303
      %v1305 = vrot.slane %v1300, %v1304
      %v1307 = vadd.f32 %v1299, %v1305
      %v1308 = vpack.c.bf16 %v1307, %v1307
      %vm1309 = vcmask 257024
      %1310 = vst.msk [vmem:[%s435] sm:$0xf] %vm1309, %v1308
      %p1311 = scmp.lt.s32.totalorder %s24, 3
      %s1312 = scalar_select %p1311, %s24, 3
      %s1313 = smul.addr %s1312, 4
      %s1314 = scalar_lea.vmem %s13, %s1313
      // Predicated region
      $region73: #{puretran_forward.5} parent=71 // pred_check
        %p1315 = pneg %p320
      $region74: #{puretran_forward.5} parent=71 // pred_check_branch
        %1317 = sbr.rel (%p1315) target = $region76
      $region75: #{puretran_forward.5} parent=71 // pred_region
        _
      $region76: #{puretran_forward.5} parent=71 // pred_fallthru
        _
    $region72: #{puretran_forward.5} parent=5 // pred_fallthru
      _
    %p1318 = scmp.le.s32.totalorder 2, %s19
    // Predicated region
    $region77: #{puretran_forward.5} parent=5 // pred_check
      %p1319 = pneg %p1318
    $region78: #{puretran_forward.5} parent=5 // pred_check_branch
      %1321 = sbr.rel (%p1319) target = $region80
    $region79: #{puretran_forward.5} parent=5 // pred_region
      %s1322 = ssub.s32 %s19, 2
      // Predicated region
      $region81: #{puretran_forward.5} parent=79 // pred_check
        %p1323 = pneg %p326
      $region82: #{puretran_forward.5} parent=79 // pred_check_branch
        %1325 = sbr.rel (%p1323) target = $region84
      $region83: #{puretran_forward.5} parent=79 // pred_region
        %p1326 = scmp.lt.s32.totalorder %s25, 3
        %s1327 = scalar_select %p1326, %s25, 3
        %s1328 = smul.addr %s1327, 4
        %s1329 = scalar_lea.vmem %s13, %s1328
      $region84: #{puretran_forward.5} parent=79 // pred_fallthru
        _
    $region80: #{puretran_forward.5} parent=5 // pred_fallthru
      _
  $region6: #{puretran_forward.5} parent=0 // loop_footer
    %s23 = sadd.s32 1, %s19
  $region7: #{puretran_forward.5} parent=0 // loop_footer_branch
    %18 = sbr.rel target = $region3
  $region8: #{puretran_forward.5} parent=0 // loop_exit
    _

</llo_original>
